<compile_context>
chip_gen: v7x
topology: tpu7x:2x2x1
jax: 0.10.0
libtpu: 0.0.40
codegen_flags: <defaults>
</compile_context>

<pallas_src>
import numpy as np
import jax
import jax.numpy as jnp
from jax.experimental import pallas as pl
from jax.experimental.pallas import tpu as pltpu

L_FIELD = 0.004       # light-field physical size
LMBDA = 5.15e-07      # wavelength
Z_DIST = 0.08         # propagation distance


def _prop_kernel(ur_ref, ui_ref, w_ref, h_ref, or_ref, oi_ref):
    """One grid step: TB fields.
       ur/ui : (TB, M, N) bf16  field real/imag
       w_ref : (8,  M, M) bf16  [WLr,WLi, WRr,WRi, VLr,VLi, VRr,VRi] DFT matrices
       h_ref : (2,  M, N) f32   fftshift(H) real/imag
       or/oi : (TB, M, N) f32   output real/imag
    """
    bf16 = jnp.bfloat16

    def cmm(ar, ai, br, bi):
        # Gauss/Karatsuba 3-multiply complex matmul; bf16 operands, f32 accumulation.
        t1 = jnp.dot(ar, br, preferred_element_type=jnp.float32)
        t2 = jnp.dot(ai, bi, preferred_element_type=jnp.float32)
        t3 = jnp.dot(ar + ai, br + bi, preferred_element_type=jnp.float32)
        return t1 - t2, t3 - t1 - t2

    @pl.loop(0, ur_ref.shape[0])
    def _(b):
        # U1 = fft2(fftshift(u)) = WL @ u @ WR   (shifts folded into WL / WR)
        tr, ti = cmm(w_ref[0], w_ref[1], ur_ref[b], ui_ref[b])
        u1r, u1i = cmm(tr.astype(bf16), ti.astype(bf16), w_ref[2], w_ref[3])
        # U2 = H * U1   (elementwise complex multiply, kept in f32 on the VPU)
        u2r = h_ref[0] * u1r - h_ref[1] * u1i
        u2i = h_ref[0] * u1i + h_ref[1] * u1r
        # u2 = ifftshift(ifft2(U2)) = VL @ U2 @ VR   (shift + 1/(M*N) folded)
        sr, si = cmm(w_ref[4], w_ref[5], u2r.astype(bf16), u2i.astype(bf16))
        vr, vi = cmm(sr.astype(bf16), si.astype(bf16), w_ref[6], w_ref[7])
        or_ref[b] = vr
        oi_ref[b] = vi


def _dft_operands(M, N, L, lmbda, z):
    """Host-side (float64) construction of shift-folded DFT matrices and H."""
    s = M // 2
    n = np.arange(M)
    F = np.exp(-2j * np.pi * np.outer(n, n) / M)          # symmetric DFT matrix
    Fc = np.conj(F)
    # Fold fftshift(u) / ifftshift(result) into the DFT matrices:
    #   F @ roll(u, s, 0)      == roll(F, -s, axis=1) @ u
    #   roll(u, s, 1) @ F      == u @ roll(F, -s, axis=0)
    #   roll(A @ X, -s, 0)     == roll(A, -s, axis=0) @ X
    #   roll(X @ B, -s, 1)     == X @ roll(B, -s, axis=1)
    WL = np.roll(F, -s, axis=1)
    WR = np.roll(F, -s, axis=0)
    VL = np.roll(Fc, -s, axis=0)
    VR = np.roll(Fc, -s, axis=1) / float(M * N)           # fold ifft2 scaling
    W = np.stack([WL.real, WL.imag, WR.real, WR.imag,
                  VL.real, VL.imag, VR.real, VR.imag])

    dx = L / M
    k = 2.0 * np.pi / lmbda
    fx = np.linspace(-1.0 / (2.0 * dx), 1.0 / (2.0 * dx) - 1.0 / L, M)
    FX, FY = np.meshgrid(fx, fx, indexing="ij")
    H = np.exp(-1j * np.pi * lmbda * z * (FX ** 2 + FY ** 2)) * np.exp(1j * k * z)
    H = np.fft.fftshift(H, axes=(-2, -1))
    Hri = np.stack([H.real, H.imag])
    return (jnp.asarray(W, dtype=jnp.bfloat16),
            jnp.asarray(Hri, dtype=jnp.float32))


def propagation_layer_pallas(u1, L=L_FIELD, lmbda=LMBDA, z=Z_DIST, tb=4):
    """Angular-spectrum propagation of a complex field u1 of shape (..., M, N)."""
    u1 = jnp.asarray(u1)
    if not jnp.iscomplexobj(u1):
        u1 = u1.astype(jnp.complex64)
    batch_shape = u1.shape[:-2]
    M, N = u1.shape[-2:]
    assert M == N, "square field expected (matches the reference fx grid)"
    B = int(np.prod(batch_shape, dtype=np.int64))
    u1 = u1.reshape(B, M, N)

    W, Hri = _dft_operands(M, N, L, lmbda, z)

    # bf16 field planes: MXU is bf16-native (f32 accumulation), halves input DMA.
    ur = jnp.real(u1).astype(jnp.bfloat16)
    ui = jnp.imag(u1).astype(jnp.bfloat16)

    # TB fields per grid step; pad batch to a multiple of TB.
    tb = max(1, min(int(tb), B))
    Bp = ((B + tb - 1) // tb) * tb
    if Bp != B:
        pad = ((0, Bp - B), (0, 0), (0, 0))
        ur = jnp.pad(ur, pad)
        ui = jnp.pad(ui, pad)

    out_r, out_i = pl.pallas_call(
        _prop_kernel,
        out_shape=(jax.ShapeDtypeStruct((Bp, M, N), jnp.float32),
                   jax.ShapeDtypeStruct((Bp, M, N), jnp.float32)),
        grid_spec=pltpu.PrefetchScalarGridSpec(
            num_scalar_prefetch=0,
            grid=(Bp // tb,),
            in_specs=[
                pl.BlockSpec((tb, M, N), lambda b: (b, 0, 0)),   # ur block
                pl.BlockSpec((tb, M, N), lambda b: (b, 0, 0)),   # ui block
                # Grid-invariant operands (tiny here).  For very large M, add
                # pipeline_mode=pl.Buffered(1) to avoid wasted double-buffers.
                pl.BlockSpec((8, M, M), lambda b: (0, 0, 0)),    # DFT twiddles
                pl.BlockSpec((2, M, N), lambda b: (0, 0, 0)),    # transfer fn H
            ],
            out_specs=[
                pl.BlockSpec((tb, M, N), lambda b: (b, 0, 0)),
                pl.BlockSpec((tb, M, N), lambda b: (b, 0, 0)),
            ],
        ),
        compiler_params=pltpu.CompilerParams(
            dimension_semantics=("parallel",),   # batch axis -> v7x megacore
            # Explicit VMEM budget: ~6 MiB resident at (tb=4, M=128); raise for
            # larger M / tb (v5e/v6e have 128 MiB physical, v7x 64 MiB).
            vmem_limit_bytes=32 * 1024 * 1024,
        ),
    )(ur, ui, W, Hri)

    u2 = (out_r + 1j * out_i).astype(jnp.complex64)[:B]
    return u2.reshape(*batch_shape, M, N)


if __name__ == "__main__":
    # Small deterministic complex input field: batch=8, M=N=128 (lane-dense).
    B, M = 8, 128
    key = jax.random.PRNGKey(0)
    kr, ki = jax.random.split(key)
    u1 = (jax.random.normal(kr, (B, M, M), dtype=jnp.float32)
          + 1j * jax.random.normal(ki, (B, M, M), dtype=jnp.float32))

    u2 = propagation_layer_pallas(u1)
    jax.block_until_ready(u2)

    # Plain-JAX FFT reference of the original (unfolded) formulation, complex64.
    dx = L_FIELD / M
    kwave = 2.0 * np.pi / LMBDA
    fx = np.linspace(-1.0 / (2.0 * dx), 1.0 / (2.0 * dx) - 1.0 / L_FIELD, M)
    FX, FY = np.meshgrid(fx, fx, indexing="ij")
    Hnp = (np.exp(-1j * np.pi * LMBDA * Z_DIST * (FX ** 2 + FY ** 2))
           * np.exp(1j * kwave * Z_DIST))
    Hc = jnp.asarray(np.fft.fftshift(Hnp, axes=(-2, -1)), dtype=jnp.complex64)
    U1 = jnp.fft.fft2(jnp.fft.fftshift(u1.astype(jnp.complex64), axes=(-2, -1)))
    ref = jnp.fft.ifftshift(jnp.fft.ifft2(Hc * U1), axes=(-2, -1))

    diff = u2 - ref
    rel_rms = float(jnp.linalg.norm(diff) / jnp.linalg.norm(ref))
    max_err = float(jnp.max(jnp.abs(diff)))
    # bf16 twiddles / operands with f32 accumulation -> ~1% relative error vs
    # the complex64 FFT reference at M=128; thresholds leave >2x margin.
    assert rel_rms < 3e-2, f"relative RMS error too large: {rel_rms}"
    assert max_err < 2e-1, f"max abs error too large: {max_err}"

    print("KERNEL_OK")
</pallas_src>

<mosaic_0001>
module attributes {stable_mosaic.version = 11 : i64} {
  func.func @_prop_kernel(%arg0: i32, %arg1: memref<4x128x128xbf16, #tpu.memory_space<vmem>>, %arg2: memref<4x128x128xbf16, #tpu.memory_space<vmem>>, %arg3: memref<8x128x128xbf16, #tpu.memory_space<vmem>>, %arg4: memref<2x128x128xf32, #tpu.memory_space<vmem>>, %arg5: memref<4x128x128xf32, #tpu.memory_space<vmem>>, %arg6: memref<4x128x128xf32, #tpu.memory_space<vmem>>) attributes {dimension_semantics = [#tpu.dimension_semantics<parallel>], iteration_bounds = array<i64: 2>, scalar_prefetch = 0 : i64, scratch_operands = 0 : i64, tpu.core_type = #tpu.core_type<tc>, window_params = [{transform_indices = @transform_0, window_bounds = array<i64: 4, 128, 128>}, {transform_indices = @transform_1, window_bounds = array<i64: 4, 128, 128>}, {pipeline_mode = #tpu.pipeline_mode<synchronous>, transform_indices = @transform_2, window_bounds = array<i64: 8, 128, 128>}, {pipeline_mode = #tpu.pipeline_mode<synchronous>, transform_indices = @transform_3, window_bounds = array<i64: 2, 128, 128>}, {transform_indices = @transform_4, window_bounds = array<i64: 4, 128, 128>}, {transform_indices = @transform_5, window_bounds = array<i64: 4, 128, 128>}]} {
    %c0_i32 = arith.constant 0 : i32
    %c4_i32 = arith.constant 4 : i32
    %0 = arith.addi %c0_i32, %c4_i32 : i32
    %c1_i32 = arith.constant 1 : i32
    scf.for %arg7 = %c0_i32 to %0 step %c1_i32  : i32 {
      %c1_i32_1 = arith.constant 1 : i32
      %1 = arith.muli %arg7, %c1_i32_1 : i32
      %c0_i32_2 = arith.constant 0 : i32
      %2 = arith.addi %c0_i32_2, %1 : i32
      %c0 = arith.constant 0 : index
      %c0_3 = arith.constant 0 : index
      %c0_4 = arith.constant 0 : index
      %3 = vector.load %arg3[%c0, %c0_3, %c0_4] : memref<8x128x128xbf16, #tpu.memory_space<vmem>>, vector<1x128x128xbf16>
      %4 = vector.shape_cast %3 : vector<1x128x128xbf16> to vector<128x128xbf16>
      %c1 = arith.constant 1 : index
      %c0_5 = arith.constant 0 : index
      %c0_6 = arith.constant 0 : index
      %5 = vector.load %arg3[%c1, %c0_5, %c0_6] : memref<8x128x128xbf16, #tpu.memory_space<vmem>>, vector<1x128x128xbf16>
      %6 = vector.shape_cast %5 : vector<1x128x128xbf16> to vector<128x128xbf16>
      %7 = arith.index_cast %2 : i32 to index
      %c0_7 = arith.constant 0 : index
      %c0_8 = arith.constant 0 : index
      %8 = vector.load %arg1[%7, %c0_7, %c0_8] : memref<4x128x128xbf16, #tpu.memory_space<vmem>>, vector<1x128x128xbf16>
      %9 = vector.shape_cast %8 : vector<1x128x128xbf16> to vector<128x128xbf16>
      %10 = arith.index_cast %2 : i32 to index
      %c0_9 = arith.constant 0 : index
      %c0_10 = arith.constant 0 : index
      %11 = vector.load %arg2[%10, %c0_9, %c0_10] : memref<4x128x128xbf16, #tpu.memory_space<vmem>>, vector<1x128x128xbf16>
      %12 = vector.shape_cast %11 : vector<1x128x128xbf16> to vector<128x128xbf16>
      %cst = arith.constant dense<0.000000e+00> : vector<128x128xf32>
      %13 = tpu.matmul %4, %9, %cst {dimension_numbers = #tpu.dot_dimension_numbers<[1], [0], [0], [1], [0, 0, 1, 1], [], []>} : vector<128x128xbf16>, vector<128x128xbf16>, vector<128x128xf32> -> vector<128x128xf32>
      %cst_11 = arith.constant dense<0.000000e+00> : vector<128x128xf32>
      %14 = tpu.matmul %6, %12, %cst_11 {dimension_numbers = #tpu.dot_dimension_numbers<[1], [0], [0], [1], [0, 0, 1, 1], [], []>} : vector<128x128xbf16>, vector<128x128xbf16>, vector<128x128xf32> -> vector<128x128xf32>
      %15 = arith.addf %4, %6 : vector<128x128xbf16>
      %16 = arith.addf %9, %12 : vector<128x128xbf16>
      %cst_12 = arith.constant dense<0.000000e+00> : vector<128x128xf32>
      %17 = tpu.matmul %15, %16, %cst_12 {dimension_numbers = #tpu.dot_dimension_numbers<[1], [0], [0], [1], [0, 0, 1, 1], [], []>} : vector<128x128xbf16>, vector<128x128xbf16>, vector<128x128xf32> -> vector<128x128xf32>
      %18 = arith.subf %13, %14 : vector<128x128xf32>
      %19 = arith.subf %17, %13 : vector<128x128xf32>
      %20 = arith.subf %19, %14 : vector<128x128xf32>
      %21 = arith.truncf %18 : vector<128x128xf32> to vector<128x128xbf16>
      %22 = arith.truncf %20 : vector<128x128xf32> to vector<128x128xbf16>
      %c2 = arith.constant 2 : index
      %c0_13 = arith.constant 0 : index
      %c0_14 = arith.constant 0 : index
      %23 = vector.load %arg3[%c2, %c0_13, %c0_14] : memref<8x128x128xbf16, #tpu.memory_space<vmem>>, vector<1x128x128xbf16>
      %24 = vector.shape_cast %23 : vector<1x128x128xbf16> to vector<128x128xbf16>
      %c3 = arith.constant 3 : index
      %c0_15 = arith.constant 0 : index
      %c0_16 = arith.constant 0 : index
      %25 = vector.load %arg3[%c3, %c0_15, %c0_16] : memref<8x128x128xbf16, #tpu.memory_space<vmem>>, vector<1x128x128xbf16>
      %26 = vector.shape_cast %25 : vector<1x128x128xbf16> to vector<128x128xbf16>
      %cst_17 = arith.constant dense<0.000000e+00> : vector<128x128xf32>
      %27 = tpu.matmul %21, %24, %cst_17 {dimension_numbers = #tpu.dot_dimension_numbers<[1], [0], [0], [1], [0, 0, 1, 1], [], []>} : vector<128x128xbf16>, vector<128x128xbf16>, vector<128x128xf32> -> vector<128x128xf32>
      %cst_18 = arith.constant dense<0.000000e+00> : vector<128x128xf32>
      %28 = tpu.matmul %22, %26, %cst_18 {dimension_numbers = #tpu.dot_dimension_numbers<[1], [0], [0], [1], [0, 0, 1, 1], [], []>} : vector<128x128xbf16>, vector<128x128xbf16>, vector<128x128xf32> -> vector<128x128xf32>
      %29 = arith.addf %21, %22 : vector<128x128xbf16>
      %30 = arith.addf %24, %26 : vector<128x128xbf16>
      %cst_19 = arith.constant dense<0.000000e+00> : vector<128x128xf32>
      %31 = tpu.matmul %29, %30, %cst_19 {dimension_numbers = #tpu.dot_dimension_numbers<[1], [0], [0], [1], [0, 0, 1, 1], [], []>} : vector<128x128xbf16>, vector<128x128xbf16>, vector<128x128xf32> -> vector<128x128xf32>
      %32 = arith.subf %27, %28 : vector<128x128xf32>
      %33 = arith.subf %31, %27 : vector<128x128xf32>
      %34 = arith.subf %33, %28 : vector<128x128xf32>
      %c0_20 = arith.constant 0 : index
      %c0_21 = arith.constant 0 : index
      %c0_22 = arith.constant 0 : index
      %35 = vector.load %arg4[%c0_20, %c0_21, %c0_22] : memref<2x128x128xf32, #tpu.memory_space<vmem>>, vector<1x128x128xf32>
      %36 = vector.shape_cast %35 : vector<1x128x128xf32> to vector<128x128xf32>
      %37 = arith.mulf %36, %32 : vector<128x128xf32>
      %c1_23 = arith.constant 1 : index
      %c0_24 = arith.constant 0 : index
      %c0_25 = arith.constant 0 : index
      %38 = vector.load %arg4[%c1_23, %c0_24, %c0_25] : memref<2x128x128xf32, #tpu.memory_space<vmem>>, vector<1x128x128xf32>
      %39 = vector.shape_cast %38 : vector<1x128x128xf32> to vector<128x128xf32>
      %40 = arith.mulf %39, %34 : vector<128x128xf32>
      %41 = arith.subf %37, %40 : vector<128x128xf32>
      %c0_26 = arith.constant 0 : index
      %c0_27 = arith.constant 0 : index
      %c0_28 = arith.constant 0 : index
      %42 = vector.load %arg4[%c0_26, %c0_27, %c0_28] : memref<2x128x128xf32, #tpu.memory_space<vmem>>, vector<1x128x128xf32>
      %43 = vector.shape_cast %42 : vector<1x128x128xf32> to vector<128x128xf32>
      %44 = arith.mulf %43, %34 : vector<128x128xf32>
      %c1_29 = arith.constant 1 : index
      %c0_30 = arith.constant 0 : index
      %c0_31 = arith.constant 0 : index
      %45 = vector.load %arg4[%c1_29, %c0_30, %c0_31] : memref<2x128x128xf32, #tpu.memory_space<vmem>>, vector<1x128x128xf32>
      %46 = vector.shape_cast %45 : vector<1x128x128xf32> to vector<128x128xf32>
      %47 = arith.mulf %46, %32 : vector<128x128xf32>
      %48 = arith.addf %44, %47 : vector<128x128xf32>
      %c4 = arith.constant 4 : index
      %c0_32 = arith.constant 0 : index
      %c0_33 = arith.constant 0 : index
      %49 = vector.load %arg3[%c4, %c0_32, %c0_33] : memref<8x128x128xbf16, #tpu.memory_space<vmem>>, vector<1x128x128xbf16>
      %50 = vector.shape_cast %49 : vector<1x128x128xbf16> to vector<128x128xbf16>
      %c5 = arith.constant 5 : index
      %c0_34 = arith.constant 0 : index
      %c0_35 = arith.constant 0 : index
      %51 = vector.load %arg3[%c5, %c0_34, %c0_35] : memref<8x128x128xbf16, #tpu.memory_space<vmem>>, vector<1x128x128xbf16>
      %52 = vector.shape_cast %51 : vector<1x128x128xbf16> to vector<128x128xbf16>
      %53 = arith.truncf %41 : vector<128x128xf32> to vector<128x128xbf16>
      %54 = arith.truncf %48 : vector<128x128xf32> to vector<128x128xbf16>
      %cst_36 = arith.constant dense<0.000000e+00> : vector<128x128xf32>
      %55 = tpu.matmul %50, %53, %cst_36 {dimension_numbers = #tpu.dot_dimension_numbers<[1], [0], [0], [1], [0, 0, 1, 1], [], []>} : vector<128x128xbf16>, vector<128x128xbf16>, vector<128x128xf32> -> vector<128x128xf32>
      %cst_37 = arith.constant dense<0.000000e+00> : vector<128x128xf32>
      %56 = tpu.matmul %52, %54, %cst_37 {dimension_numbers = #tpu.dot_dimension_numbers<[1], [0], [0], [1], [0, 0, 1, 1], [], []>} : vector<128x128xbf16>, vector<128x128xbf16>, vector<128x128xf32> -> vector<128x128xf32>
      %57 = arith.addf %50, %52 : vector<128x128xbf16>
      %58 = arith.addf %53, %54 : vector<128x128xbf16>
      %cst_38 = arith.constant dense<0.000000e+00> : vector<128x128xf32>
      %59 = tpu.matmul %57, %58, %cst_38 {dimension_numbers = #tpu.dot_dimension_numbers<[1], [0], [0], [1], [0, 0, 1, 1], [], []>} : vector<128x128xbf16>, vector<128x128xbf16>, vector<128x128xf32> -> vector<128x128xf32>
      %60 = arith.subf %55, %56 : vector<128x128xf32>
      %61 = arith.subf %59, %55 : vector<128x128xf32>
      %62 = arith.subf %61, %56 : vector<128x128xf32>
      %63 = arith.truncf %60 : vector<128x128xf32> to vector<128x128xbf16>
      %64 = arith.truncf %62 : vector<128x128xf32> to vector<128x128xbf16>
      %c6 = arith.constant 6 : index
      %c0_39 = arith.constant 0 : index
      %c0_40 = arith.constant 0 : index
      %65 = vector.load %arg3[%c6, %c0_39, %c0_40] : memref<8x128x128xbf16, #tpu.memory_space<vmem>>, vector<1x128x128xbf16>
      %66 = vector.shape_cast %65 : vector<1x128x128xbf16> to vector<128x128xbf16>
      %c7 = arith.constant 7 : index
      %c0_41 = arith.constant 0 : index
      %c0_42 = arith.constant 0 : index
      %67 = vector.load %arg3[%c7, %c0_41, %c0_42] : memref<8x128x128xbf16, #tpu.memory_space<vmem>>, vector<1x128x128xbf16>
      %68 = vector.shape_cast %67 : vector<1x128x128xbf16> to vector<128x128xbf16>
      %cst_43 = arith.constant dense<0.000000e+00> : vector<128x128xf32>
      %69 = tpu.matmul %63, %66, %cst_43 {dimension_numbers = #tpu.dot_dimension_numbers<[1], [0], [0], [1], [0, 0, 1, 1], [], []>} : vector<128x128xbf16>, vector<128x128xbf16>, vector<128x128xf32> -> vector<128x128xf32>
      %cst_44 = arith.constant dense<0.000000e+00> : vector<128x128xf32>
      %70 = tpu.matmul %64, %68, %cst_44 {dimension_numbers = #tpu.dot_dimension_numbers<[1], [0], [0], [1], [0, 0, 1, 1], [], []>} : vector<128x128xbf16>, vector<128x128xbf16>, vector<128x128xf32> -> vector<128x128xf32>
      %71 = arith.addf %63, %64 : vector<128x128xbf16>
      %72 = arith.addf %66, %68 : vector<128x128xbf16>
      %cst_45 = arith.constant dense<0.000000e+00> : vector<128x128xf32>
      %73 = tpu.matmul %71, %72, %cst_45 {dimension_numbers = #tpu.dot_dimension_numbers<[1], [0], [0], [1], [0, 0, 1, 1], [], []>} : vector<128x128xbf16>, vector<128x128xbf16>, vector<128x128xf32> -> vector<128x128xf32>
      %74 = arith.subf %69, %70 : vector<128x128xf32>
      %75 = arith.subf %73, %69 : vector<128x128xf32>
      %76 = arith.subf %75, %70 : vector<128x128xf32>
      %77 = arith.index_cast %2 : i32 to index
      %c0_46 = arith.constant 0 : index
      %c0_47 = arith.constant 0 : index
      %78 = vector.load %arg5[%77, %c0_46, %c0_47] : memref<4x128x128xf32, #tpu.memory_space<vmem>>, vector<1x128x128xf32>
      %79 = vector.shape_cast %78 : vector<1x128x128xf32> to vector<128x128xf32>
      %80 = vector.shape_cast %74 : vector<128x128xf32> to vector<1x128x128xf32>
      tpu.vector_store %arg5[%77, %c0_46, %c0_47], %80 {strides = array<i32>} : memref<4x128x128xf32, #tpu.memory_space<vmem>>, vector<1x128x128xf32>,
      %81 = arith.index_cast %2 : i32 to index
      %c0_48 = arith.constant 0 : index
      %c0_49 = arith.constant 0 : index
      %82 = vector.load %arg6[%81, %c0_48, %c0_49] : memref<4x128x128xf32, #tpu.memory_space<vmem>>, vector<1x128x128xf32>
      %83 = vector.shape_cast %82 : vector<1x128x128xf32> to vector<128x128xf32>
      %84 = vector.shape_cast %76 : vector<128x128xf32> to vector<1x128x128xf32>
      tpu.vector_store %arg6[%81, %c0_48, %c0_49], %84 {strides = array<i32>} : memref<4x128x128xf32, #tpu.memory_space<vmem>>, vector<1x128x128xf32>,
    }
    %c4_i32_0 = arith.constant 4 : i32
    return
  }
  func.func @transform_0(%arg0: i32) -> (i32, i32, i32) {
    %c0_i32 = arith.constant 0 : i32
    %c0_i32_0 = arith.constant 0 : i32
    %c0_i32_1 = arith.constant 0 : i32
    return %arg0, %c0_i32, %c0_i32_0 : i32, i32, i32
  }
  func.func @transform_1(%arg0: i32) -> (i32, i32, i32) {
    %c0_i32 = arith.constant 0 : i32
    %c0_i32_0 = arith.constant 0 : i32
    %c0_i32_1 = arith.constant 0 : i32
    return %arg0, %c0_i32, %c0_i32_0 : i32, i32, i32
  }
  func.func @transform_2(%arg0: i32) -> (i32, i32, i32) {
    %c0_i32 = arith.constant 0 : i32
    %c0_i32_0 = arith.constant 0 : i32
    %c0_i32_1 = arith.constant 0 : i32
    %c0_i32_2 = arith.constant 0 : i32
    return %c0_i32, %c0_i32_0, %c0_i32_1 : i32, i32, i32
  }
  func.func @transform_3(%arg0: i32) -> (i32, i32, i32) {
    %c0_i32 = arith.constant 0 : i32
    %c0_i32_0 = arith.constant 0 : i32
    %c0_i32_1 = arith.constant 0 : i32
    %c0_i32_2 = arith.constant 0 : i32
    return %c0_i32, %c0_i32_0, %c0_i32_1 : i32, i32, i32
  }
  func.func @transform_4(%arg0: i32) -> (i32, i32, i32) {
    %c0_i32 = arith.constant 0 : i32
    %c0_i32_0 = arith.constant 0 : i32
    %c0_i32_1 = arith.constant 0 : i32
    return %arg0, %c0_i32, %c0_i32_0 : i32, i32, i32
  }
  func.func @transform_5(%arg0: i32) -> (i32, i32, i32) {
    %c0_i32 = arith.constant 0 : i32
    %c0_i32_0 = arith.constant 0 : i32
    %c0_i32_1 = arith.constant 0 : i32
    return %arg0, %c0_i32, %c0_i32_0 : i32, i32, i32
  }
}

</mosaic_0001>

<llo_original>
// kernel: tpu_custom_call.1
$region0: #{tpu_custom_call.1}
  #allocation0 [shape = 'u32[]', space=smem, size = 0x4, offset = 0x4, fixed_abs, tag = 'smem constant byte address 0x4 - core index']
  #allocation1 [shape = 'u32[144,128]{1,0:T(1,128)}', space=vmem, size = 0x12000, scoped, tag = 'internal scratch']
  %s0 = inlined_call_operand.hbm [shape: bf16[8,128,128], index: 0, kind: input, shape index: {}]
  %s1 = inlined_call_operand.hbm [shape: bf16[8,128,128], index: 1, kind: input, shape index: {}]
  %s2 = inlined_call_operand.hbm [shape: bf16[8,128,128], index: 2, kind: input, shape index: {}]
  %s3 = inlined_call_operand.hbm [shape: f32[2,128,128], index: 3, kind: input, shape index: {}]
  %s4 = inlined_call_operand.hbm [shape: f32[8,128,128], index: 4, kind: output, shape index: {0}]
  %s5 = inlined_call_operand.hbm [shape: f32[8,128,128], index: 5, kind: output, shape index: {1}]
  %6 = xla_tuple %s4, %s5
  %s7 = sld [smem:[#allocation0]]
  $region80: #{tpu_custom_call.1} parent=0
    _
  %s9 = ssub.s32 1, %s7
  %s10 = scalar_select 0, %s9, %s7
  $region1: #{tpu_custom_call.1} parent=0
    #allocation2 [shape = 'u8[262144]{0}', space=vmem, size = 0x40000, scoped, tag = 'input window, operand 0']
    #allocation3 [shape = 's32[2]{0}', space=sflag, size = 0x8, scoped, tag = 'scoped memory for tpu_custom_call.1']
    #allocation4 [shape = 's32[2]{0}', space=sflag, size = 0x8, scoped, tag = 'scoped memory for tpu_custom_call.1']
    #allocation5 [shape = 'u8[262144]{0}', space=vmem, size = 0x40000, scoped, tag = 'input window, operand 1']
    #allocation6 [shape = 's32[2]{0}', space=sflag, size = 0x8, scoped, tag = 'scoped memory for tpu_custom_call.1']
    #allocation7 [shape = 'u8[262144]{0}', space=vmem, size = 0x40000, scoped, tag = 'input window, operand 2, single buffered']
    #allocation8 [shape = 'u8[131072]{0}', space=vmem, size = 0x20000, scoped, tag = 'input window, operand 3, single buffered']
    #allocation9 [shape = 's32[1]{0}', space=sflag, size = 0x4, scoped, tag = 'scoped memory for tpu_custom_call.1']
    #allocation10 [shape = 'u8[524288]{0}', space=vmem, size = 0x80000, scoped, tag = 'output window, operand 0']
    #allocation11 [shape = 'u8[524288]{0}', space=vmem, size = 0x80000, scoped, tag = 'output window, operand 1']
    #allocation12 [shape = 's32[2]{0}', space=sflag, size = 0x8, scoped, tag = 'scoped memory for tpu_custom_call.1']
    %11 = vsyncpa [#allocation3], 0
    %s12 = scalar_lea.sflag [#allocation3], 1
    %13 = vsyncpa %s12, 0
    %14 = vsyncpa [#allocation6], 0
    %s15 = scalar_lea.sflag [#allocation6], 1
    %16 = vsyncpa %s15, 0
    %17 = vsyncpa [#allocation9], 0
    %18 = vsyncpa [#allocation4], 0
    %s19 = scalar_lea.sflag [#allocation4], 1
    %20 = vsyncpa %s19, 0
    %21 = vsyncpa [#allocation12], 0
    %s22 = scalar_lea.sflag [#allocation12], 1
    %23 = vsyncpa %s22, 0
    loop: start=0, step=1, limit=4
    $region2: #{tpu_custom_call.1} parent=1 // loop_pre_header
      _
    $region3: #{tpu_custom_call.1} parent=1 // loop_header
      %s25 = sphi 0, %s29
      %p26 = scmp.ge.s32.totalorder %s25, 4
      %s35 = sphi 0, %s37
      %s38 = sphi 0, %s35
      %s39 = sphi 0, %s38
      %s55 = sphi 0, %s39
      %s61 = sphi 0, %s63
      %s64 = sphi 0, %s61
      %s65 = sphi 0, %s64
      %s81 = sphi 0, %s65
      %s85 = sphi 0, %s85
      %s87 = sphi 0, %s85
      %s88 = sphi 0, %s87
      %s102 = sphi 0, %s88
      %s106 = sphi 0, %s106
      %s108 = sphi 0, %s106
      %s109 = sphi 0, %s108
      %s123 = sphi 0, %s109
      %s129 = sphi 0, %s131
      %s132 = sphi 0, %s129
      %s133 = sphi 0, %s132
      %s149 = sphi 0, %s133
      %s155 = sphi 0, %s157
      %s158 = sphi 0, %s155
      %s159 = sphi 0, %s158
      %s175 = sphi 0, %s159
    $region4: #{tpu_custom_call.1} parent=1 // loop_header_branch
      %28 = sbr.rel (%p26) target = $region8
    $region5: #{tpu_custom_call.1} parent=1 // loop_body
      %s30 = ssub.s32 %s25, 1
      %s31 = ssub.s32 %s25, 2
      %s32 = sadd.s32 %s25, 1
      %s33 = ssub.s32 %s25, %s32
      %p34 = scmp.eq.s32.totalorder %s33, 0
      %s36 = sadd.s32 %s35, 1
      %s37 = scalar_select %p34, %s35, %s36
      %p40 = pneg %p34
      %p41 = scmp.eq.s32.totalorder %s25, 1
      %p42 = por %p40, %p41
      %p43 = scmp.ne.s32.totalorder %s35, %s38
      %p44 = scmp.eq.s32.totalorder %s25, 0
      %p45 = por %p43, %p44
      %p46 = scmp.ne.s32.totalorder %s35, %s38
      %p47 = scmp.eq.s32.totalorder %s30, 1
      %p48 = por %p46, %p47
      %p49 = scmp.ne.s32.totalorder %s38, %s39
      %p50 = scmp.eq.s32.totalorder %s30, 0
      %p51 = por %p49, %p50
      %p52 = scmp.ne.s32.totalorder %s38, %s39
      %p53 = scmp.eq.s32.totalorder %s31, 1
      %p54 = por %p52, %p53
      %p56 = scmp.ne.s32.totalorder %s39, %s55
      %p57 = scmp.eq.s32.totalorder %s31, 0
      %p58 = por %p56, %p57
      %s59 = ssub.s32 %s25, %s32
      %p60 = scmp.eq.s32.totalorder %s59, 0
      %s62 = sadd.s32 %s61, 1
      %s63 = scalar_select %p60, %s61, %s62
      %p66 = pneg %p60
      %p67 = scmp.eq.s32.totalorder %s25, 1
      %p68 = por %p66, %p67
      %p69 = scmp.ne.s32.totalorder %s61, %s64
      %p70 = scmp.eq.s32.totalorder %s25, 0
      %p71 = por %p69, %p70
      %p72 = scmp.ne.s32.totalorder %s61, %s64
      %p73 = scmp.eq.s32.totalorder %s30, 1
      %p74 = por %p72, %p73
      %p75 = scmp.ne.s32.totalorder %s64, %s65
      %p76 = scmp.eq.s32.totalorder %s30, 0
      %p77 = por %p75, %p76
      %p78 = scmp.ne.s32.totalorder %s64, %s65
      %p79 = scmp.eq.s32.totalorder %s31, 1
      %p80 = por %p78, %p79
      %p82 = scmp.ne.s32.totalorder %s65, %s81
      %p83 = scmp.eq.s32.totalorder %s31, 0
      %p84 = por %p82, %p83
      %s86 = sadd.s32 %s85, 1
      %p89 = scmp.eq.s32.totalorder %s25, 1
      %p90 = scmp.ne.s32.totalorder %s85, %s87
      %p91 = scmp.eq.s32.totalorder %s25, 0
      %p92 = por %p90, %p91
      %p93 = scmp.ne.s32.totalorder %s85, %s87
      %p94 = scmp.eq.s32.totalorder %s30, 1
      %p95 = por %p93, %p94
      %p96 = scmp.ne.s32.totalorder %s87, %s88
      %p97 = scmp.eq.s32.totalorder %s30, 0
      %p98 = por %p96, %p97
      %p99 = scmp.ne.s32.totalorder %s87, %s88
      %p100 = scmp.eq.s32.totalorder %s31, 1
      %p101 = por %p99, %p100
      %p103 = scmp.ne.s32.totalorder %s88, %s102
      %p104 = scmp.eq.s32.totalorder %s31, 0
      %p105 = por %p103, %p104
      %s107 = sadd.s32 %s106, 1
      %p110 = scmp.eq.s32.totalorder %s25, 1
      %p111 = scmp.ne.s32.totalorder %s106, %s108
      %p112 = scmp.eq.s32.totalorder %s25, 0
      %p113 = por %p111, %p112
      %p114 = scmp.ne.s32.totalorder %s106, %s108
      %p115 = scmp.eq.s32.totalorder %s30, 1
      %p116 = por %p114, %p115
      %p117 = scmp.ne.s32.totalorder %s108, %s109
      %p118 = scmp.eq.s32.totalorder %s30, 0
      %p119 = por %p117, %p118
      %p120 = scmp.ne.s32.totalorder %s108, %s109
      %p121 = scmp.eq.s32.totalorder %s31, 1
      %p122 = por %p120, %p121
      %p124 = scmp.ne.s32.totalorder %s109, %s123
      %p125 = scmp.eq.s32.totalorder %s31, 0
      %p126 = por %p124, %p125
      %s127 = ssub.s32 %s25, %s32
      %p128 = scmp.eq.s32.totalorder %s127, 0
      %s130 = sadd.s32 %s129, 1
      %s131 = scalar_select %p128, %s129, %s130
      %p134 = pneg %p128
      %p135 = scmp.eq.s32.totalorder %s25, 1
      %p136 = por %p134, %p135
      %p137 = scmp.ne.s32.totalorder %s129, %s132
      %p138 = scmp.eq.s32.totalorder %s25, 0
      %p139 = por %p137, %p138
      %p140 = scmp.ne.s32.totalorder %s129, %s132
      %p141 = scmp.eq.s32.totalorder %s30, 1
      %p142 = por %p140, %p141
      %p143 = scmp.ne.s32.totalorder %s132, %s133
      %p144 = scmp.eq.s32.totalorder %s30, 0
      %p145 = por %p143, %p144
      %p146 = scmp.ne.s32.totalorder %s132, %s133
      %p147 = scmp.eq.s32.totalorder %s31, 1
      %p148 = por %p146, %p147
      %p150 = scmp.ne.s32.totalorder %s133, %s149
      %p151 = scmp.eq.s32.totalorder %s31, 0
      %p152 = por %p150, %p151
      %s153 = ssub.s32 %s25, %s32
      %p154 = scmp.eq.s32.totalorder %s153, 0
      %s156 = sadd.s32 %s155, 1
      %s157 = scalar_select %p154, %s155, %s156
      %p160 = pneg %p154
      %p161 = scmp.eq.s32.totalorder %s25, 1
      %p162 = por %p160, %p161
      %p163 = scmp.ne.s32.totalorder %s155, %s158
      %p164 = scmp.eq.s32.totalorder %s25, 0
      %p165 = por %p163, %p164
      %p166 = scmp.ne.s32.totalorder %s155, %s158
      %p167 = scmp.eq.s32.totalorder %s30, 1
      %p168 = por %p166, %p167
      %p169 = scmp.ne.s32.totalorder %s158, %s159
      %p170 = scmp.eq.s32.totalorder %s30, 0
      %p171 = por %p169, %p170
      %p172 = scmp.ne.s32.totalorder %s158, %s159
      %p173 = scmp.eq.s32.totalorder %s31, 1
      %p174 = por %p172, %p173
      %p176 = scmp.ne.s32.totalorder %s159, %s175
      %p177 = scmp.eq.s32.totalorder %s31, 0
      %p178 = por %p176, %p177
      %p179 = scmp.le.s32.totalorder 1, %s25
      %p180 = scmp.lt.s32.totalorder %s25, 3
      %p181 = pnand %p179, %p180
      %p182 = pneg %p181
      // Predicated region
      $region9: #{tpu_custom_call.1} parent=5 // pred_check
        _
      $region10: #{tpu_custom_call.1} parent=5 // pred_check_branch
        %184 = sbr.rel (%p181) target = $region12
      $region11: #{tpu_custom_call.1} parent=5 // pred_region
        %s185 = ssub.s32 %s25, 1
        // Predicated region
        $region13: #{tpu_custom_call.1} parent=11 // pred_check
          %p186 = pneg %p98
        $region14: #{tpu_custom_call.1} parent=11 // pred_check_branch
          %188 = sbr.rel (%p186) target = $region16
        $region15: #{tpu_custom_call.1} parent=11 // pred_region
          %s190 = ssub.s32 8192, 8192
          %191 = vsyncadd [#allocation6], %s190
          %s192 = sshll.u32 [#allocation7], 4
          %s193 = int_to_ptr.vmem [resolvable:$true] %s192
          %198 = dma.hbm_to_vmem [thread:$0]  %s2, 8192, %s193, [#allocation6], 64, 64, 4
        $region16: #{tpu_custom_call.1} parent=11 // pred_fallthru
          _
        // Predicated region
        $region17: #{tpu_custom_call.1} parent=11 // pred_check
          %p199 = pneg %p119
        $region18: #{tpu_custom_call.1} parent=11 // pred_check_branch
          %201 = sbr.rel (%p199) target = $region20
        $region19: #{tpu_custom_call.1} parent=11 // pred_region
          %s203 = ssub.s32 4096, 4096
          %204 = vsyncadd [#allocation9], %s203
          %s205 = sshll.u32 [#allocation8], 4
          %s206 = int_to_ptr.vmem [resolvable:$true] %s205
          %211 = dma.hbm_to_vmem [thread:$0]  %s3, 4096, %s206, [#allocation9], 128, 128, 8
        $region20: #{tpu_custom_call.1} parent=11 // pred_fallthru
          _
      $region12: #{tpu_custom_call.1} parent=5 // pred_fallthru
        _
      %p212 = scmp.lt.s32.totalorder %s25, 2
      // Predicated region
      $region21: #{tpu_custom_call.1} parent=5 // pred_check
        %p213 = pneg %p212
      $region22: #{tpu_custom_call.1} parent=5 // pred_check_branch
        %215 = sbr.rel (%p213) target = $region24
      $region23: #{tpu_custom_call.1} parent=5 // pred_region
        // Predicated region
        $region25: #{tpu_custom_call.1} parent=23 // pred_check
          %p216 = pneg %p45
        $region26: #{tpu_custom_call.1} parent=23 // pred_check_branch
          %218 = sbr.rel (%p216) target = $region28
        $region27: #{tpu_custom_call.1} parent=23 // pred_region
          %s219 = sand.u32 %s35, 1
          %s220 = scalar_lea.sflag [#allocation3], %s219
          %s221 = sand.u32 %s35, 1
          %s222 = smul.addr %s221, 256
          %s223 = scalar_lea.vmem [#allocation2], %s222
          %s224 = smul.u32 4, %s25
          %s226 = ssub.s32 4096, 4096
          %227 = vsyncadd %s220, %s226
          %s228 = smul.addr %s224, 16
          %s229 = smul.addr %s228, 64
          %s230 = scalar_lea.hbm %s0, %s229
          %s231 = sshll.u32 %s223, 4
          %s232 = int_to_ptr.vmem [resolvable:$true] %s231
          %237 = dma.hbm_to_vmem [thread:$0]  %s230, 4096, %s232, %s220, 64, 64, 4
        $region28: #{tpu_custom_call.1} parent=23 // pred_fallthru
          _
        // Predicated region
        $region29: #{tpu_custom_call.1} parent=23 // pred_check
          %p238 = pneg %p71
        $region30: #{tpu_custom_call.1} parent=23 // pred_check_branch
          %240 = sbr.rel (%p238) target = $region32
        $region31: #{tpu_custom_call.1} parent=23 // pred_region
          %s241 = sand.u32 %s25, 1
          %s242 = scalar_lea.sflag [#allocation6], %s241
          %s243 = sand.u32 %s61, 1
          %s244 = smul.addr %s243, 256
          %s245 = scalar_lea.vmem [#allocation5], %s244
          %s246 = smul.u32 4, %s25
          %s248 = ssub.s32 4096, 4096
          %249 = vsyncadd %s242, %s248
          %s250 = smul.addr %s246, 16
          %s251 = smul.addr %s250, 64
          %s252 = scalar_lea.hbm %s1, %s251
          %s253 = sshll.u32 %s245, 4
          %s254 = int_to_ptr.vmem [resolvable:$true] %s253
          %259 = dma.hbm_to_vmem [thread:$0]  %s252, 4096, %s254, %s242, 64, 64, 4
        $region32: #{tpu_custom_call.1} parent=23 // pred_fallthru
          _
      $region24: #{tpu_custom_call.1} parent=5 // pred_fallthru
        _
      %p260 = scmp.le.s32.totalorder 1, %s25
      %p261 = scmp.lt.s32.totalorder %s25, 3
      %p262 = pnand %p260, %p261
      %p263 = pneg %p262
      // Predicated region
      $region33: #{tpu_custom_call.1} parent=5 // pred_check
        _
      $region34: #{tpu_custom_call.1} parent=5 // pred_check_branch
        %265 = sbr.rel (%p262) target = $region36
      $region35: #{tpu_custom_call.1} parent=5 // pred_region
        %s266 = ssub.s32 %s25, 1
        %s267 = sand.u32 %s38, 1
        %s268 = scalar_lea.sflag [#allocation3], %s267
        %s269 = sand.u32 %s38, 1
        %s270 = smul.addr %s269, 256
        %s271 = scalar_lea.vmem [#allocation2], %s270
        // Predicated region
        $region37: #{tpu_custom_call.1} parent=35 // pred_check
          %p272 = pneg %p51
        $region38: #{tpu_custom_call.1} parent=35 // pred_check_branch
          %274 = sbr.rel (%p272) target = $region40
        $region39: #{tpu_custom_call.1} parent=35 // pred_region
          %275 = dma.done %s268, 4096
        $region40: #{tpu_custom_call.1} parent=35 // pred_fallthru
          _
        %s276 = sand.u32 %s30, 1
        %s277 = scalar_lea.sflag [#allocation6], %s276
        %s278 = sand.u32 %s64, 1
        %s279 = smul.addr %s278, 256
        %s280 = scalar_lea.vmem [#allocation5], %s279
        // Predicated region
        $region41: #{tpu_custom_call.1} parent=35 // pred_check
          %p281 = pneg %p77
        $region42: #{tpu_custom_call.1} parent=35 // pred_check_branch
          %283 = sbr.rel (%p281) target = $region44
        $region43: #{tpu_custom_call.1} parent=35 // pred_region
          %284 = dma.done %s277, 4096
        $region44: #{tpu_custom_call.1} parent=35 // pred_fallthru
          _
        // Predicated region
        $region45: #{tpu_custom_call.1} parent=35 // pred_check
          %p285 = pneg %p98
        $region46: #{tpu_custom_call.1} parent=35 // pred_check_branch
          %287 = sbr.rel (%p285) target = $region48
        $region47: #{tpu_custom_call.1} parent=35 // pred_region
          %288 = dma.done [#allocation6], 8192
        $region48: #{tpu_custom_call.1} parent=35 // pred_fallthru
          _
        // Predicated region
        $region49: #{tpu_custom_call.1} parent=35 // pred_check
          %p289 = pneg %p119
        $region50: #{tpu_custom_call.1} parent=35 // pred_check_branch
          %291 = sbr.rel (%p289) target = $region52
        $region51: #{tpu_custom_call.1} parent=35 // pred_region
          %292 = dma.done [#allocation9], 4096
        $region52: #{tpu_custom_call.1} parent=35 // pred_fallthru
          _
        %s293 = sand.u32 %s38, 1
        %s294 = scalar_lea.sflag [#allocation3], %s293
        %s295 = sand.u32 %s38, 1
        %s296 = smul.addr %s295, 256
        %s297 = scalar_lea.vmem [#allocation2], %s296
        %p298 = pneg %p51
        %p299 = pneg %p48
        %s300 = sand.u32 %s30, 1
        %s301 = scalar_lea.sflag [#allocation6], %s300
        %s302 = sand.u32 %s64, 1
        %s303 = smul.addr %s302, 256
        %s304 = scalar_lea.vmem [#allocation5], %s303
        %p305 = pneg %p77
        %p306 = pneg %p74
        %p307 = pneg %p98
        %p308 = pneg %p95
        %p309 = pneg %p119
        %p310 = pneg %p116
        %p311 = pneg %p145
        %p312 = pneg %p142
        %s313 = sand.u32 %s132, 1
        %s314 = scalar_lea.sflag [#allocation4], %s313
        %s315 = sand.u32 %s132, 1
        %s316 = smul.addr %s315, 512
        %s317 = scalar_lea.vmem [#allocation10], %s316
        %p318 = pneg %p171
        %p319 = pneg %p168
        %s320 = sand.u32 %s158, 1
        %s321 = scalar_lea.sflag [#allocation12], %s320
        %s322 = sand.u32 %s158, 1
        %s323 = smul.addr %s322, 512
        %s324 = scalar_lea.vmem [#allocation11], %s323
        %s325 = smul.u32 4, %s30
        %s326 = smul.u32 4, %s30
        %s327 = smul.u32 4, %s30
        %s328 = smul.u32 4, %s30
        loop: start=0, step=1, limit=4
        $region53: #{tpu_custom_call.1} parent=35 // loop_pre_header
          _
        $region54: #{tpu_custom_call.1} parent=35 // loop_header
          %s331 = sphi 0, %s335
          %p332 = scmp.ge.s32.totalorder %s331, 4
        $region55: #{tpu_custom_call.1} parent=35 // loop_header_branch
          %334 = sbr.rel (%p332) target = $region59
        $region56: #{tpu_custom_call.1} parent=35 // loop_body
          %v336 = vld [vmem:[#allocation7] sm:$0xf]
          %v337 = vld [vmem:[#allocation7 + $0x4] sm:$0xf]
          %v338 = vld [vmem:[#allocation7 + $0x8] sm:$0xf]
          %v339 = vld [vmem:[#allocation7 + $0xc] sm:$0xf]
          %v340 = vld [vmem:[#allocation7 + $0x10] sm:$0xf]
          %v341 = vld [vmem:[#allocation7 + $0x14] sm:$0xf]
          %v342 = vld [vmem:[#allocation7 + $0x18] sm:$0xf]
          %v343 = vld [vmem:[#allocation7 + $0x1c] sm:$0xf]
          %v344 = vld [vmem:[#allocation7 + $0x20] sm:$0xf]
          %v345 = vld [vmem:[#allocation7 + $0x24] sm:$0xf]
          %v346 = vld [vmem:[#allocation7 + $0x28] sm:$0xf]
          %v347 = vld [vmem:[#allocation7 + $0x2c] sm:$0xf]
          %v348 = vld [vmem:[#allocation7 + $0x30] sm:$0xf]
          %v349 = vld [vmem:[#allocation7 + $0x34] sm:$0xf]
          %v350 = vld [vmem:[#allocation7 + $0x38] sm:$0xf]
          %v351 = vld [vmem:[#allocation7 + $0x3c] sm:$0xf]
          %s352 = scalar_lea.vmem [#allocation7], 64
          %v353 = vld [vmem:[%s352] sm:$0xf]
          %v354 = vld [vmem:[%s352 + $0x4] sm:$0xf]
          %v355 = vld [vmem:[%s352 + $0x8] sm:$0xf]
          %v356 = vld [vmem:[%s352 + $0xc] sm:$0xf]
          %v357 = vld [vmem:[%s352 + $0x10] sm:$0xf]
          %v358 = vld [vmem:[%s352 + $0x14] sm:$0xf]
          %v359 = vld [vmem:[%s352 + $0x18] sm:$0xf]
          %v360 = vld [vmem:[%s352 + $0x1c] sm:$0xf]
          %v361 = vld [vmem:[%s352 + $0x20] sm:$0xf]
          %v362 = vld [vmem:[%s352 + $0x24] sm:$0xf]
          %v363 = vld [vmem:[%s352 + $0x28] sm:$0xf]
          %v364 = vld [vmem:[%s352 + $0x2c] sm:$0xf]
          %v365 = vld [vmem:[%s352 + $0x30] sm:$0xf]
          %v366 = vld [vmem:[%s352 + $0x34] sm:$0xf]
          %v367 = vld [vmem:[%s352 + $0x38] sm:$0xf]
          %v368 = vld [vmem:[%s352 + $0x3c] sm:$0xf]
          %s369 = smul.u32 %s331, 16
          %s370 = smul.addr %s369, 4
          %s371 = scalar_lea.vmem %s271, %s370 [#allocation2]
          %v372 = vld [vmem:[%s371] sm:$0xf]
          %v373 = vld [vmem:[%s371 + $0x4] sm:$0xf]
          %v374 = vld [vmem:[%s371 + $0x8] sm:$0xf]
          %v375 = vld [vmem:[%s371 + $0xc] sm:$0xf]
          %v376 = vld [vmem:[%s371 + $0x10] sm:$0xf]
          %v377 = vld [vmem:[%s371 + $0x14] sm:$0xf]
          %v378 = vld [vmem:[%s371 + $0x18] sm:$0xf]
          %v379 = vld [vmem:[%s371 + $0x1c] sm:$0xf]
          %v380 = vld [vmem:[%s371 + $0x20] sm:$0xf]
          %v381 = vld [vmem:[%s371 + $0x24] sm:$0xf]
          %v382 = vld [vmem:[%s371 + $0x28] sm:$0xf]
          %v383 = vld [vmem:[%s371 + $0x2c] sm:$0xf]
          %v384 = vld [vmem:[%s371 + $0x30] sm:$0xf]
          %v385 = vld [vmem:[%s371 + $0x34] sm:$0xf]
          %v386 = vld [vmem:[%s371 + $0x38] sm:$0xf]
          %v387 = vld [vmem:[%s371 + $0x3c] sm:$0xf]
          %s388 = smul.addr %s369, 4
          %s389 = scalar_lea.vmem %s280, %s388 [#allocation5]
          %v390 = vld [vmem:[%s389] sm:$0xf]
          %v391 = vld [vmem:[%s389 + $0x4] sm:$0xf]
          %v392 = vld [vmem:[%s389 + $0x8] sm:$0xf]
          %v393 = vld [vmem:[%s389 + $0xc] sm:$0xf]
          %v394 = vld [vmem:[%s389 + $0x10] sm:$0xf]
          %v395 = vld [vmem:[%s389 + $0x14] sm:$0xf]
          %v396 = vld [vmem:[%s389 + $0x18] sm:$0xf]
          %v397 = vld [vmem:[%s389 + $0x1c] sm:$0xf]
          %v398 = vld [vmem:[%s389 + $0x20] sm:$0xf]
          %v399 = vld [vmem:[%s389 + $0x24] sm:$0xf]
          %v400 = vld [vmem:[%s389 + $0x28] sm:$0xf]
          %v401 = vld [vmem:[%s389 + $0x2c] sm:$0xf]
          %v402 = vld [vmem:[%s389 + $0x30] sm:$0xf]
          %v403 = vld [vmem:[%s389 + $0x34] sm:$0xf]
          %v404 = vld [vmem:[%s389 + $0x38] sm:$0xf]
          %v405 = vld [vmem:[%s389 + $0x3c] sm:$0xf]
          %v422 = vunpack.c.l.b16 %v336
          %v423 = vunpack.c.l.b16 %v337
          %v424 = vunpack.c.l.b16 %v338
          %v425 = vunpack.c.l.b16 %v339
          %v426 = vunpack.c.l.b16 %v340
          %v427 = vunpack.c.l.b16 %v341
          %v428 = vunpack.c.l.b16 %v342
          %v429 = vunpack.c.l.b16 %v343
          %v430 = vunpack.c.l.b16 %v344
          %v431 = vunpack.c.l.b16 %v345
          %v432 = vunpack.c.l.b16 %v346
          %v433 = vunpack.c.l.b16 %v347
          %v434 = vunpack.c.l.b16 %v348
          %v435 = vunpack.c.l.b16 %v349
          %v436 = vunpack.c.l.b16 %v350
          %v437 = vunpack.c.l.b16 %v351
          %v438 = vpack.c.b16 %v423, %v422
          %v439 = vpack.c.b16 %v425, %v424
          %v440 = vpack.c.b16 %v427, %v426
          %v441 = vpack.c.b16 %v429, %v428
          %v442 = vpack.c.b16 %v431, %v430
          %v443 = vpack.c.b16 %v433, %v432
          %v444 = vpack.c.b16 %v435, %v434
          %v445 = vpack.c.b16 %v437, %v436
          %v470 = vunpack.c.l.b16 %v372
          %v471 = vunpack.c.l.b16 %v373
          %v472 = vunpack.c.l.b16 %v374
          %v473 = vunpack.c.l.b16 %v375
          %v474 = vunpack.c.l.b16 %v376
          %v475 = vunpack.c.l.b16 %v377
          %v476 = vunpack.c.l.b16 %v378
          %v477 = vunpack.c.l.b16 %v379
          %v478 = vunpack.c.l.b16 %v380
          %v479 = vunpack.c.l.b16 %v381
          %v480 = vunpack.c.l.b16 %v382
          %v481 = vunpack.c.l.b16 %v383
          %v482 = vunpack.c.l.b16 %v384
          %v483 = vunpack.c.l.b16 %v385
          %v484 = vunpack.c.l.b16 %v386
          %v485 = vunpack.c.l.b16 %v387
          %v486 = vpack.c.b16 %v471, %v470
          %v487 = vpack.c.b16 %v473, %v472
          %v488 = vpack.c.b16 %v475, %v474
          %v489 = vpack.c.b16 %v477, %v476
          %v490 = vpack.c.b16 %v479, %v478
          %v491 = vpack.c.b16 %v481, %v480
          %v492 = vpack.c.b16 %v483, %v482
          %v493 = vpack.c.b16 %v485, %v484
          %502 = vmatprep.subr.bf16.mxu0 0
          %503 = vmatpush1.bf16.msra.mxu0 %v486
          %504 = vmatprep.subr.bf16.mxu0 0
          %505 = vmatpush1.bf16.msra.mxu0 %v487
          %506 = vmatprep.subr.bf16.mxu0 0
          %507 = vmatpush1.bf16.msra.mxu0 %v488
          %508 = vmatprep.subr.bf16.mxu0 0
          %509 = vmatpush1.bf16.msra.mxu0 %v489
          %510 = vmatprep.subr.bf16.mxu0 0
          %511 = vmatpush1.bf16.msra.mxu0 %v490
          %512 = vmatprep.subr.bf16.mxu0 0
          %513 = vmatpush1.bf16.msra.mxu0 %v491
          %514 = vmatprep.subr.bf16.mxu0 0
          %515 = vmatpush1.bf16.msra.mxu0 %v492
          %516 = vmatprep.subr.bf16.mxu0 0
          %517 = vmatpush1.bf16.msra.mxu0 %v493
          %518 = vmatprep.subr.bf16.mxu0 0
          %519 = vmatpush1.bf16.msra.mxu0 0
          %520 = vmatprep.subr.bf16.mxu0 0
          %521 = vmatpush1.bf16.msra.mxu0 0
          %522 = vmatprep.subr.bf16.mxu0 0
          %523 = vmatpush1.bf16.msra.mxu0 0
          %524 = vmatprep.subr.bf16.mxu0 0
          %525 = vmatpush1.bf16.msra.mxu0 0
          %526 = vmatprep.subr.bf16.mxu0 0
          %527 = vmatpush1.bf16.msra.mxu0 0
          %528 = vmatprep.subr.bf16.mxu0 0
          %529 = vmatpush1.bf16.msra.mxu0 0
          %530 = vmatprep.subr.bf16.mxu0 0
          %531 = vmatpush1.bf16.msra.mxu0 0
          %532 = vmatprep.subr.bf16.mxu0 0
          %533 = vmatpush1.bf16.msra.mxu0 0
          %534 = vmatprep.mubr.bf16.mxu0 0
          %535 = vmatmul.mubr.bf16.gmra.mrb[0].mxu0 %v438
          %v536 = vpop.f32.mrb[0].mxu0
          %v537 = vadd.f32 0.0, %v536
          %v538 = vpop.f32.mrb[0].mxu0
          %v539 = vpop.f32.mrb[0].mxu0
          %v540 = vadd.f32 0.0, %v539
          %v541 = vpop.f32.mrb[0].mxu0
          %542 = vmatprep.mubr.bf16.mxu0 0
          %543 = vmatmul.mubr.bf16.gmra.mrb[0].mxu0 %v439
          %v544 = vpop.f32.mrb[0].mxu0
          %v545 = vadd.f32 0.0, %v544
          %v546 = vpop.f32.mrb[0].mxu0
          %v547 = vpop.f32.mrb[0].mxu0
          %v548 = vadd.f32 0.0, %v547
          %v549 = vpop.f32.mrb[0].mxu0
          %550 = vmatprep.mubr.bf16.mxu0 0
          %551 = vmatmul.mubr.bf16.gmra.mrb[0].mxu0 %v440
          %v552 = vpop.f32.mrb[0].mxu0
          %v553 = vadd.f32 0.0, %v552
          %v554 = vpop.f32.mrb[0].mxu0
          %v555 = vpop.f32.mrb[0].mxu0
          %v556 = vadd.f32 0.0, %v555
          %v557 = vpop.f32.mrb[0].mxu0
          %558 = vmatprep.mubr.bf16.mxu0 0
          %559 = vmatmul.mubr.bf16.gmra.mrb[0].mxu0 %v441
          %v560 = vpop.f32.mrb[0].mxu0
          %v561 = vadd.f32 0.0, %v560
          %v562 = vpop.f32.mrb[0].mxu0
          %v563 = vpop.f32.mrb[0].mxu0
          %v564 = vadd.f32 0.0, %v563
          %v565 = vpop.f32.mrb[0].mxu0
          %566 = vmatprep.mubr.bf16.mxu0 0
          %567 = vmatmul.mubr.bf16.gmra.mrb[0].mxu0 %v442
          %v568 = vpop.f32.mrb[0].mxu0
          %v569 = vadd.f32 0.0, %v568
          %v570 = vpop.f32.mrb[0].mxu0
          %v571 = vpop.f32.mrb[0].mxu0
          %v572 = vadd.f32 0.0, %v571
          %v573 = vpop.f32.mrb[0].mxu0
          %574 = vmatprep.mubr.bf16.mxu0 0
          %575 = vmatmul.mubr.bf16.gmra.mrb[0].mxu0 %v443
          %v576 = vpop.f32.mrb[0].mxu0
          %v577 = vadd.f32 0.0, %v576
          %v578 = vpop.f32.mrb[0].mxu0
          %v579 = vpop.f32.mrb[0].mxu0
          %v580 = vadd.f32 0.0, %v579
          %v581 = vpop.f32.mrb[0].mxu0
          %582 = vmatprep.mubr.bf16.mxu0 0
          %583 = vmatmul.mubr.bf16.gmra.mrb[0].mxu0 %v444
          %v584 = vpop.f32.mrb[0].mxu0
          %v585 = vadd.f32 0.0, %v584
          %v586 = vpop.f32.mrb[0].mxu0
          %v587 = vpop.f32.mrb[0].mxu0
          %v588 = vadd.f32 0.0, %v587
          %v589 = vpop.f32.mrb[0].mxu0
          %590 = vmatprep.mubr.bf16.mxu0 0
          %591 = vmatmul.mubr.bf16.gmra.mrb[0].mxu0 %v445
          %v592 = vpop.f32.mrb[0].mxu0
          %v593 = vadd.f32 0.0, %v592
          %v594 = vpop.f32.mrb[0].mxu0
          %v595 = vpop.f32.mrb[0].mxu0
          %v596 = vadd.f32 0.0, %v595
          %v597 = vpop.f32.mrb[0].mxu0
          %598 = vdwg.mxu0
          %v615 = vunpack.c.l.b16 %v353
          %v616 = vunpack.c.l.b16 %v354
          %v617 = vunpack.c.l.b16 %v355
          %v618 = vunpack.c.l.b16 %v356
          %v619 = vunpack.c.l.b16 %v357
          %v620 = vunpack.c.l.b16 %v358
          %v621 = vunpack.c.l.b16 %v359
          %v622 = vunpack.c.l.b16 %v360
          %v623 = vunpack.c.l.b16 %v361
          %v624 = vunpack.c.l.b16 %v362
          %v625 = vunpack.c.l.b16 %v363
          %v626 = vunpack.c.l.b16 %v364
          %v627 = vunpack.c.l.b16 %v365
          %v628 = vunpack.c.l.b16 %v366
          %v629 = vunpack.c.l.b16 %v367
          %v630 = vunpack.c.l.b16 %v368
          %v631 = vpack.c.b16 %v616, %v615
          %v632 = vpack.c.b16 %v618, %v617
          %v633 = vpack.c.b16 %v620, %v619
          %v634 = vpack.c.b16 %v622, %v621
          %v635 = vpack.c.b16 %v624, %v623
          %v636 = vpack.c.b16 %v626, %v625
          %v637 = vpack.c.b16 %v628, %v627
          %v638 = vpack.c.b16 %v630, %v629
          %v663 = vunpack.c.l.b16 %v390
          %v664 = vunpack.c.l.b16 %v391
          %v665 = vunpack.c.l.b16 %v392
          %v666 = vunpack.c.l.b16 %v393
          %v667 = vunpack.c.l.b16 %v394
          %v668 = vunpack.c.l.b16 %v395
          %v669 = vunpack.c.l.b16 %v396
          %v670 = vunpack.c.l.b16 %v397
          %v671 = vunpack.c.l.b16 %v398
          %v672 = vunpack.c.l.b16 %v399
          %v673 = vunpack.c.l.b16 %v400
          %v674 = vunpack.c.l.b16 %v401
          %v675 = vunpack.c.l.b16 %v402
          %v676 = vunpack.c.l.b16 %v403
          %v677 = vunpack.c.l.b16 %v404
          %v678 = vunpack.c.l.b16 %v405
          %v679 = vpack.c.b16 %v664, %v663
          %v680 = vpack.c.b16 %v666, %v665
          %v681 = vpack.c.b16 %v668, %v667
          %v682 = vpack.c.b16 %v670, %v669
          %v683 = vpack.c.b16 %v672, %v671
          %v684 = vpack.c.b16 %v674, %v673
          %v685 = vpack.c.b16 %v676, %v675
          %v686 = vpack.c.b16 %v678, %v677
          %695 = vmatprep.subr.bf16.mxu0 0
          %696 = vmatpush1.bf16.msra.mxu0 %v679
          %697 = vmatprep.subr.bf16.mxu0 0
          %698 = vmatpush1.bf16.msra.mxu0 %v680
          %699 = vmatprep.subr.bf16.mxu0 0
          %700 = vmatpush1.bf16.msra.mxu0 %v681
          %701 = vmatprep.subr.bf16.mxu0 0
          %702 = vmatpush1.bf16.msra.mxu0 %v682
          %703 = vmatprep.subr.bf16.mxu0 0
          %704 = vmatpush1.bf16.msra.mxu0 %v683
          %705 = vmatprep.subr.bf16.mxu0 0
          %706 = vmatpush1.bf16.msra.mxu0 %v684
          %707 = vmatprep.subr.bf16.mxu0 0
          %708 = vmatpush1.bf16.msra.mxu0 %v685
          %709 = vmatprep.subr.bf16.mxu0 0
          %710 = vmatpush1.bf16.msra.mxu0 %v686
          %711 = vmatprep.subr.bf16.mxu0 0
          %712 = vmatpush1.bf16.msra.mxu0 0
          %713 = vmatprep.subr.bf16.mxu0 0
          %714 = vmatpush1.bf16.msra.mxu0 0
          %715 = vmatprep.subr.bf16.mxu0 0
          %716 = vmatpush1.bf16.msra.mxu0 0
          %717 = vmatprep.subr.bf16.mxu0 0
          %718 = vmatpush1.bf16.msra.mxu0 0
          %719 = vmatprep.subr.bf16.mxu0 0
          %720 = vmatpush1.bf16.msra.mxu0 0
          %721 = vmatprep.subr.bf16.mxu0 0
          %722 = vmatpush1.bf16.msra.mxu0 0
          %723 = vmatprep.subr.bf16.mxu0 0
          %724 = vmatpush1.bf16.msra.mxu0 0
          %725 = vmatprep.subr.bf16.mxu0 0
          %726 = vmatpush1.bf16.msra.mxu0 0
          %727 = vmatprep.mubr.bf16.mxu0 0
          %728 = vmatmul.mubr.bf16.gmra.mrb[0].mxu0 %v631
          %v729 = vpop.f32.mrb[0].mxu0
          %v730 = vadd.f32 0.0, %v729
          %v731 = vpop.f32.mrb[0].mxu0
          %v732 = vpop.f32.mrb[0].mxu0
          %v733 = vadd.f32 0.0, %v732
          %v734 = vpop.f32.mrb[0].mxu0
          %735 = vmatprep.mubr.bf16.mxu0 0
          %736 = vmatmul.mubr.bf16.gmra.mrb[0].mxu0 %v632
          %v737 = vpop.f32.mrb[0].mxu0
          %v738 = vadd.f32 0.0, %v737
          %v739 = vpop.f32.mrb[0].mxu0
          %v740 = vpop.f32.mrb[0].mxu0
          %v741 = vadd.f32 0.0, %v740
          %v742 = vpop.f32.mrb[0].mxu0
          %743 = vmatprep.mubr.bf16.mxu0 0
          %744 = vmatmul.mubr.bf16.gmra.mrb[0].mxu0 %v633
          %v745 = vpop.f32.mrb[0].mxu0
          %v746 = vadd.f32 0.0, %v745
          %v747 = vpop.f32.mrb[0].mxu0
          %v748 = vpop.f32.mrb[0].mxu0
          %v749 = vadd.f32 0.0, %v748
          %v750 = vpop.f32.mrb[0].mxu0
          %751 = vmatprep.mubr.bf16.mxu0 0
          %752 = vmatmul.mubr.bf16.gmra.mrb[0].mxu0 %v634
          %v753 = vpop.f32.mrb[0].mxu0
          %v754 = vadd.f32 0.0, %v753
          %v755 = vpop.f32.mrb[0].mxu0
          %v756 = vpop.f32.mrb[0].mxu0
          %v757 = vadd.f32 0.0, %v756
          %v758 = vpop.f32.mrb[0].mxu0
          %759 = vmatprep.mubr.bf16.mxu0 0
          %760 = vmatmul.mubr.bf16.gmra.mrb[0].mxu0 %v635
          %v761 = vpop.f32.mrb[0].mxu0
          %v762 = vadd.f32 0.0, %v761
          %v763 = vpop.f32.mrb[0].mxu0
          %v764 = vpop.f32.mrb[0].mxu0
          %v765 = vadd.f32 0.0, %v764
          %v766 = vpop.f32.mrb[0].mxu0
          %767 = vmatprep.mubr.bf16.mxu0 0
          %768 = vmatmul.mubr.bf16.gmra.mrb[0].mxu0 %v636
          %v769 = vpop.f32.mrb[0].mxu0
          %v770 = vadd.f32 0.0, %v769
          %v771 = vpop.f32.mrb[0].mxu0
          %v772 = vpop.f32.mrb[0].mxu0
          %v773 = vadd.f32 0.0, %v772
          %v774 = vpop.f32.mrb[0].mxu0
          %775 = vmatprep.mubr.bf16.mxu0 0
          %776 = vmatmul.mubr.bf16.gmra.mrb[0].mxu0 %v637
          %v777 = vpop.f32.mrb[0].mxu0
          %v778 = vadd.f32 0.0, %v777
          %v779 = vpop.f32.mrb[0].mxu0
          %v780 = vpop.f32.mrb[0].mxu0
          %v781 = vadd.f32 0.0, %v780
          %v782 = vpop.f32.mrb[0].mxu0
          %783 = vmatprep.mubr.bf16.mxu0 0
          %784 = vmatmul.mubr.bf16.gmra.mrb[0].mxu0 %v638
          %v785 = vpop.f32.mrb[0].mxu0
          %v786 = vadd.f32 0.0, %v785
          %v787 = vpop.f32.mrb[0].mxu0
          %v788 = vpop.f32.mrb[0].mxu0
          %v789 = vadd.f32 0.0, %v788
          %v790 = vpop.f32.mrb[0].mxu0
          %791 = vdwg.mxu0
          %v792 = vadd.bf16 %v336, %v353
          %v793 = vadd.bf16 %v337, %v354
          %v794 = vadd.bf16 %v338, %v355
          %v795 = vadd.bf16 %v339, %v356
          %v796 = vadd.bf16 %v340, %v357
          %v797 = vadd.bf16 %v341, %v358
          %v798 = vadd.bf16 %v342, %v359
          %v799 = vadd.bf16 %v343, %v360
          %v800 = vadd.bf16 %v344, %v361
          %v801 = vadd.bf16 %v345, %v362
          %v802 = vadd.bf16 %v346, %v363
          %v803 = vadd.bf16 %v347, %v364
          %v804 = vadd.bf16 %v348, %v365
          %v805 = vadd.bf16 %v349, %v366
          %v806 = vadd.bf16 %v350, %v367
          %v807 = vadd.bf16 %v351, %v368
          %v808 = vadd.bf16 %v372, %v390
          %v809 = vadd.bf16 %v373, %v391
          %v810 = vadd.bf16 %v374, %v392
          %v811 = vadd.bf16 %v375, %v393
          %v812 = vadd.bf16 %v376, %v394
          %v813 = vadd.bf16 %v377, %v395
          %v814 = vadd.bf16 %v378, %v396
          %v815 = vadd.bf16 %v379, %v397
          %v816 = vadd.bf16 %v380, %v398
          %v817 = vadd.bf16 %v381, %v399
          %v818 = vadd.bf16 %v382, %v400
          %v819 = vadd.bf16 %v383, %v401
          %v820 = vadd.bf16 %v384, %v402
          %v821 = vadd.bf16 %v385, %v403
          %v822 = vadd.bf16 %v386, %v404
          %v823 = vadd.bf16 %v387, %v405
          %v840 = vunpack.c.l.b16 %v792
          %v841 = vunpack.c.l.b16 %v793
          %v842 = vunpack.c.l.b16 %v794
          %v843 = vunpack.c.l.b16 %v795
          %v844 = vunpack.c.l.b16 %v796
          %v845 = vunpack.c.l.b16 %v797
          %v846 = vunpack.c.l.b16 %v798
          %v847 = vunpack.c.l.b16 %v799
          %v848 = vunpack.c.l.b16 %v800
          %v849 = vunpack.c.l.b16 %v801
          %v850 = vunpack.c.l.b16 %v802
          %v851 = vunpack.c.l.b16 %v803
          %v852 = vunpack.c.l.b16 %v804
          %v853 = vunpack.c.l.b16 %v805
          %v854 = vunpack.c.l.b16 %v806
          %v855 = vunpack.c.l.b16 %v807
          %v856 = vpack.c.b16 %v841, %v840
          %v857 = vpack.c.b16 %v843, %v842
          %v858 = vpack.c.b16 %v845, %v844
          %v859 = vpack.c.b16 %v847, %v846
          %v860 = vpack.c.b16 %v849, %v848
          %v861 = vpack.c.b16 %v851, %v850
          %v862 = vpack.c.b16 %v853, %v852
          %v863 = vpack.c.b16 %v855, %v854
          %v888 = vunpack.c.l.b16 %v808
          %v889 = vunpack.c.l.b16 %v809
          %v890 = vunpack.c.l.b16 %v810
          %v891 = vunpack.c.l.b16 %v811
          %v892 = vunpack.c.l.b16 %v812
          %v893 = vunpack.c.l.b16 %v813
          %v894 = vunpack.c.l.b16 %v814
          %v895 = vunpack.c.l.b16 %v815
          %v896 = vunpack.c.l.b16 %v816
          %v897 = vunpack.c.l.b16 %v817
          %v898 = vunpack.c.l.b16 %v818
          %v899 = vunpack.c.l.b16 %v819
          %v900 = vunpack.c.l.b16 %v820
          %v901 = vunpack.c.l.b16 %v821
          %v902 = vunpack.c.l.b16 %v822
          %v903 = vunpack.c.l.b16 %v823
          %v904 = vpack.c.b16 %v889, %v888
          %v905 = vpack.c.b16 %v891, %v890
          %v906 = vpack.c.b16 %v893, %v892
          %v907 = vpack.c.b16 %v895, %v894
          %v908 = vpack.c.b16 %v897, %v896
          %v909 = vpack.c.b16 %v899, %v898
          %v910 = vpack.c.b16 %v901, %v900
          %v911 = vpack.c.b16 %v903, %v902
          %920 = vmatprep.subr.bf16.mxu0 0
          %921 = vmatpush1.bf16.msra.mxu0 %v904
          %922 = vmatprep.subr.bf16.mxu0 0
          %923 = vmatpush1.bf16.msra.mxu0 %v905
          %924 = vmatprep.subr.bf16.mxu0 0
          %925 = vmatpush1.bf16.msra.mxu0 %v906
          %926 = vmatprep.subr.bf16.mxu0 0
          %927 = vmatpush1.bf16.msra.mxu0 %v907
          %928 = vmatprep.subr.bf16.mxu0 0
          %929 = vmatpush1.bf16.msra.mxu0 %v908
          %930 = vmatprep.subr.bf16.mxu0 0
          %931 = vmatpush1.bf16.msra.mxu0 %v909
          %932 = vmatprep.subr.bf16.mxu0 0
          %933 = vmatpush1.bf16.msra.mxu0 %v910
          %934 = vmatprep.subr.bf16.mxu0 0
          %935 = vmatpush1.bf16.msra.mxu0 %v911
          %936 = vmatprep.subr.bf16.mxu0 0
          %937 = vmatpush1.bf16.msra.mxu0 0
          %938 = vmatprep.subr.bf16.mxu0 0
          %939 = vmatpush1.bf16.msra.mxu0 0
          %940 = vmatprep.subr.bf16.mxu0 0
          %941 = vmatpush1.bf16.msra.mxu0 0
          %942 = vmatprep.subr.bf16.mxu0 0
          %943 = vmatpush1.bf16.msra.mxu0 0
          %944 = vmatprep.subr.bf16.mxu0 0
          %945 = vmatpush1.bf16.msra.mxu0 0
          %946 = vmatprep.subr.bf16.mxu0 0
          %947 = vmatpush1.bf16.msra.mxu0 0
          %948 = vmatprep.subr.bf16.mxu0 0
          %949 = vmatpush1.bf16.msra.mxu0 0
          %950 = vmatprep.subr.bf16.mxu0 0
          %951 = vmatpush1.bf16.msra.mxu0 0
          %952 = vmatprep.mubr.bf16.mxu0 0
          %953 = vmatmul.mubr.bf16.gmra.mrb[0].mxu0 %v856
          %v954 = vpop.f32.mrb[0].mxu0
          %v955 = vadd.f32 0.0, %v954
          %v956 = vpop.f32.mrb[0].mxu0
          %v957 = vpop.f32.mrb[0].mxu0
          %v958 = vadd.f32 0.0, %v957
          %v959 = vpop.f32.mrb[0].mxu0
          %960 = vmatprep.mubr.bf16.mxu0 0
          %961 = vmatmul.mubr.bf16.gmra.mrb[0].mxu0 %v857
          %v962 = vpop.f32.mrb[0].mxu0
          %v963 = vadd.f32 0.0, %v962
          %v964 = vpop.f32.mrb[0].mxu0
          %v965 = vpop.f32.mrb[0].mxu0
          %v966 = vadd.f32 0.0, %v965
          %v967 = vpop.f32.mrb[0].mxu0
          %968 = vmatprep.mubr.bf16.mxu0 0
          %969 = vmatmul.mubr.bf16.gmra.mrb[0].mxu0 %v858
          %v970 = vpop.f32.mrb[0].mxu0
          %v971 = vadd.f32 0.0, %v970
          %v972 = vpop.f32.mrb[0].mxu0
          %v973 = vpop.f32.mrb[0].mxu0
          %v974 = vadd.f32 0.0, %v973
          %v975 = vpop.f32.mrb[0].mxu0
          %976 = vmatprep.mubr.bf16.mxu0 0
          %977 = vmatmul.mubr.bf16.gmra.mrb[0].mxu0 %v859
          %v978 = vpop.f32.mrb[0].mxu0
          %v979 = vadd.f32 0.0, %v978
          %v980 = vpop.f32.mrb[0].mxu0
          %v981 = vpop.f32.mrb[0].mxu0
          %v982 = vadd.f32 0.0, %v981
          %v983 = vpop.f32.mrb[0].mxu0
          %984 = vmatprep.mubr.bf16.mxu0 0
          %985 = vmatmul.mubr.bf16.gmra.mrb[0].mxu0 %v860
          %v986 = vpop.f32.mrb[0].mxu0
          %v987 = vadd.f32 0.0, %v986
          %v988 = vpop.f32.mrb[0].mxu0
          %v989 = vpop.f32.mrb[0].mxu0
          %v990 = vadd.f32 0.0, %v989
          %v991 = vpop.f32.mrb[0].mxu0
          %992 = vmatprep.mubr.bf16.mxu0 0
          %993 = vmatmul.mubr.bf16.gmra.mrb[0].mxu0 %v861
          %v994 = vpop.f32.mrb[0].mxu0
          %v995 = vadd.f32 0.0, %v994
          %v996 = vpop.f32.mrb[0].mxu0
          %v997 = vpop.f32.mrb[0].mxu0
          %v998 = vadd.f32 0.0, %v997
          %v999 = vpop.f32.mrb[0].mxu0
          %1000 = vmatprep.mubr.bf16.mxu0 0
          %1001 = vmatmul.mubr.bf16.gmra.mrb[0].mxu0 %v862
          %v1002 = vpop.f32.mrb[0].mxu0
          %v1003 = vadd.f32 0.0, %v1002
          %v1004 = vpop.f32.mrb[0].mxu0
          %v1005 = vpop.f32.mrb[0].mxu0
          %v1006 = vadd.f32 0.0, %v1005
          %v1007 = vpop.f32.mrb[0].mxu0
          %1008 = vmatprep.mubr.bf16.mxu0 0
          %1009 = vmatmul.mubr.bf16.gmra.mrb[0].mxu0 %v863
          %v1010 = vpop.f32.mrb[0].mxu0
          %v1011 = vadd.f32 0.0, %v1010
          %v1012 = vpop.f32.mrb[0].mxu0
          %v1013 = vpop.f32.mrb[0].mxu0
          %v1014 = vadd.f32 0.0, %v1013
          %v1015 = vpop.f32.mrb[0].mxu0
          %1016 = vdwg.mxu0
          %v1017 = vsub.f32 %v537, %v730
          %v1018 = vsub.f32 %v540, %v733
          %v1019 = vsub.f32 %v545, %v738
          %v1020 = vsub.f32 %v548, %v741
          %v1021 = vsub.f32 %v553, %v746
          %v1022 = vsub.f32 %v556, %v749
          %v1023 = vsub.f32 %v561, %v754
          %v1024 = vsub.f32 %v564, %v757
          %v1025 = vsub.f32 %v569, %v762
          %v1026 = vsub.f32 %v572, %v765
          %v1027 = vsub.f32 %v577, %v770
          %v1028 = vsub.f32 %v580, %v773
          %v1029 = vsub.f32 %v585, %v778
          %v1030 = vsub.f32 %v588, %v781
          %v1031 = vsub.f32 %v593, %v786
          %v1032 = vsub.f32 %v596, %v789
          %v1033 = vsub.f32 %v955, %v537
          %v1034 = vsub.f32 %v958, %v540
          %v1035 = vsub.f32 %v963, %v545
          %v1036 = vsub.f32 %v966, %v548
          %v1037 = vsub.f32 %v971, %v553
          %v1038 = vsub.f32 %v974, %v556
          %v1039 = vsub.f32 %v979, %v561
          %v1040 = vsub.f32 %v982, %v564
          %v1041 = vsub.f32 %v987, %v569
          %v1042 = vsub.f32 %v990, %v572
          %v1043 = vsub.f32 %v995, %v577
          %v1044 = vsub.f32 %v998, %v580
          %v1045 = vsub.f32 %v1003, %v585
          %v1046 = vsub.f32 %v1006, %v588
          %v1047 = vsub.f32 %v1011, %v593
          %v1048 = vsub.f32 %v1014, %v596
          %v1049 = vsub.f32 %v1033, %v730
          %v1050 = vsub.f32 %v1034, %v733
          %v1051 = vsub.f32 %v1035, %v738
          %v1052 = vsub.f32 %v1036, %v741
          %v1053 = vsub.f32 %v1037, %v746
          %v1054 = vsub.f32 %v1038, %v749
          %v1055 = vsub.f32 %v1039, %v754
          %v1056 = vsub.f32 %v1040, %v757
          %v1057 = vsub.f32 %v1041, %v762
          %v1058 = vsub.f32 %v1042, %v765
          %v1059 = vsub.f32 %v1043, %v770
          %v1060 = vsub.f32 %v1044, %v773
          %v1061 = vsub.f32 %v1045, %v778
          %v1062 = vsub.f32 %v1046, %v781
          %v1063 = vsub.f32 %v1047, %v786
          %v1064 = vsub.f32 %v1048, %v789
          %v1065 = vpack.c.bf16 %v1018, %v1017
          %v1066 = vpack.c.bf16 %v1020, %v1019
          %v1067 = vpack.c.bf16 %v1022, %v1021
          %v1068 = vpack.c.bf16 %v1024, %v1023
          %v1069 = vpack.c.bf16 %v1026, %v1025
          %v1070 = vpack.c.bf16 %v1028, %v1027
          %v1071 = vpack.c.bf16 %v1030, %v1029
          %v1072 = vpack.c.bf16 %v1032, %v1031
          %v1073 = vpack.c.bf16 %v1050, %v1049
          %v1074 = vpack.c.bf16 %v1052, %v1051
          %v1075 = vpack.c.bf16 %v1054, %v1053
          %v1076 = vpack.c.bf16 %v1056, %v1055
          %v1077 = vpack.c.bf16 %v1058, %v1057
          %v1078 = vpack.c.bf16 %v1060, %v1059
          %v1079 = vpack.c.bf16 %v1062, %v1061
          %v1080 = vpack.c.bf16 %v1064, %v1063
          %s1081 = scalar_lea.vmem [#allocation7], 128
          %v1082 = vld [vmem:[%s1081] sm:$0xf]
          %v1083 = vld [vmem:[%s1081 + $0x4] sm:$0xf]
          %v1084 = vld [vmem:[%s1081 + $0x8] sm:$0xf]
          %v1085 = vld [vmem:[%s1081 + $0xc] sm:$0xf]
          %v1086 = vld [vmem:[%s1081 + $0x10] sm:$0xf]
          %v1087 = vld [vmem:[%s1081 + $0x14] sm:$0xf]
          %v1088 = vld [vmem:[%s1081 + $0x18] sm:$0xf]
          %v1089 = vld [vmem:[%s1081 + $0x1c] sm:$0xf]
          %v1090 = vld [vmem:[%s1081 + $0x20] sm:$0xf]
          %v1091 = vld [vmem:[%s1081 + $0x24] sm:$0xf]
          %v1092 = vld [vmem:[%s1081 + $0x28] sm:$0xf]
          %v1093 = vld [vmem:[%s1081 + $0x2c] sm:$0xf]
          %v1094 = vld [vmem:[%s1081 + $0x30] sm:$0xf]
          %v1095 = vld [vmem:[%s1081 + $0x34] sm:$0xf]
          %v1096 = vld [vmem:[%s1081 + $0x38] sm:$0xf]
          %v1097 = vld [vmem:[%s1081 + $0x3c] sm:$0xf]
          %s1098 = scalar_lea.vmem [#allocation7], 192
          %v1099 = vld [vmem:[%s1098] sm:$0xf]
          %v1100 = vld [vmem:[%s1098 + $0x4] sm:$0xf]
          %v1101 = vld [vmem:[%s1098 + $0x8] sm:$0xf]
          %v1102 = vld [vmem:[%s1098 + $0xc] sm:$0xf]
          %v1103 = vld [vmem:[%s1098 + $0x10] sm:$0xf]
          %v1104 = vld [vmem:[%s1098 + $0x14] sm:$0xf]
          %v1105 = vld [vmem:[%s1098 + $0x18] sm:$0xf]
          %v1106 = vld [vmem:[%s1098 + $0x1c] sm:$0xf]
          %v1107 = vld [vmem:[%s1098 + $0x20] sm:$0xf]
          %v1108 = vld [vmem:[%s1098 + $0x24] sm:$0xf]
          %v1109 = vld [vmem:[%s1098 + $0x28] sm:$0xf]
          %v1110 = vld [vmem:[%s1098 + $0x2c] sm:$0xf]
          %v1111 = vld [vmem:[%s1098 + $0x30] sm:$0xf]
          %v1112 = vld [vmem:[%s1098 + $0x34] sm:$0xf]
          %v1113 = vld [vmem:[%s1098 + $0x38] sm:$0xf]
          %v1114 = vld [vmem:[%s1098 + $0x3c] sm:$0xf]
          %v1131 = vunpack.c.l.b16 %v1082
          %v1132 = vunpack.c.l.b16 %v1083
          %v1133 = vunpack.c.l.b16 %v1084
          %v1134 = vunpack.c.l.b16 %v1085
          %v1135 = vunpack.c.l.b16 %v1086
          %v1136 = vunpack.c.l.b16 %v1087
          %v1137 = vunpack.c.l.b16 %v1088
          %v1138 = vunpack.c.l.b16 %v1089
          %v1139 = vunpack.c.l.b16 %v1090
          %v1140 = vunpack.c.l.b16 %v1091
          %v1141 = vunpack.c.l.b16 %v1092
          %v1142 = vunpack.c.l.b16 %v1093
          %v1143 = vunpack.c.l.b16 %v1094
          %v1144 = vunpack.c.l.b16 %v1095
          %v1145 = vunpack.c.l.b16 %v1096
          %v1146 = vunpack.c.l.b16 %v1097
          %v1147 = vpack.c.b16 %v1132, %v1131
          %v1148 = vpack.c.b16 %v1134, %v1133
          %v1149 = vpack.c.b16 %v1136, %v1135
          %v1150 = vpack.c.b16 %v1138, %v1137
          %v1151 = vpack.c.b16 %v1140, %v1139
          %v1152 = vpack.c.b16 %v1142, %v1141
          %v1153 = vpack.c.b16 %v1144, %v1143
          %v1154 = vpack.c.b16 %v1146, %v1145
          %1163 = vmatprep.subr.bf16.mxu0 0
          %1164 = vmatpush1.bf16.msra.mxu0 %v1147
          %1165 = vmatprep.subr.bf16.mxu0 0
          %1166 = vmatpush1.bf16.msra.mxu0 %v1148
          %1167 = vmatprep.subr.bf16.mxu0 0
          %1168 = vmatpush1.bf16.msra.mxu0 %v1149
          %1169 = vmatprep.subr.bf16.mxu0 0
          %1170 = vmatpush1.bf16.msra.mxu0 %v1150
          %1171 = vmatprep.subr.bf16.mxu0 0
          %1172 = vmatpush1.bf16.msra.mxu0 %v1151
          %1173 = vmatprep.subr.bf16.mxu0 0
          %1174 = vmatpush1.bf16.msra.mxu0 %v1152
          %1175 = vmatprep.subr.bf16.mxu0 0
          %1176 = vmatpush1.bf16.msra.mxu0 %v1153
          %1177 = vmatprep.subr.bf16.mxu0 0
          %1178 = vmatpush1.bf16.msra.mxu0 %v1154
          %1179 = vmatprep.subr.bf16.mxu0 0
          %1180 = vmatpush1.bf16.msra.mxu0 0
          %1181 = vmatprep.subr.bf16.mxu0 0
          %1182 = vmatpush1.bf16.msra.mxu0 0
          %1183 = vmatprep.subr.bf16.mxu0 0
          %1184 = vmatpush1.bf16.msra.mxu0 0
          %1185 = vmatprep.subr.bf16.mxu0 0
          %1186 = vmatpush1.bf16.msra.mxu0 0
          %1187 = vmatprep.subr.bf16.mxu0 0
          %1188 = vmatpush1.bf16.msra.mxu0 0
          %1189 = vmatprep.subr.bf16.mxu0 0
          %1190 = vmatpush1.bf16.msra.mxu0 0
          %1191 = vmatprep.subr.bf16.mxu0 0
          %1192 = vmatpush1.bf16.msra.mxu0 0
          %1193 = vmatprep.subr.bf16.mxu0 0
          %1194 = vmatpush1.bf16.msra.mxu0 0
          %1195 = vmatprep.mubr.bf16.mxu0 0
          %1196 = vmatmul.mubr.bf16.gmra.mrb[0].mxu0 %v1065
          %v1197 = vpop.f32.mrb[0].mxu0
          %v1198 = vadd.f32 0.0, %v1197
          %v1199 = vpop.f32.mrb[0].mxu0
          %v1200 = vpop.f32.mrb[0].mxu0
          %v1201 = vadd.f32 0.0, %v1200
          %v1202 = vpop.f32.mrb[0].mxu0
          %1203 = vmatprep.mubr.bf16.mxu0 0
          %1204 = vmatmul.mubr.bf16.gmra.mrb[0].mxu0 %v1066
          %v1205 = vpop.f32.mrb[0].mxu0
          %v1206 = vadd.f32 0.0, %v1205
          %v1207 = vpop.f32.mrb[0].mxu0
          %v1208 = vpop.f32.mrb[0].mxu0
          %v1209 = vadd.f32 0.0, %v1208
          %v1210 = vpop.f32.mrb[0].mxu0
          %1211 = vmatprep.mubr.bf16.mxu0 0
          %1212 = vmatmul.mubr.bf16.gmra.mrb[0].mxu0 %v1067
          %v1213 = vpop.f32.mrb[0].mxu0
          %v1214 = vadd.f32 0.0, %v1213
          %v1215 = vpop.f32.mrb[0].mxu0
          %v1216 = vpop.f32.mrb[0].mxu0
          %v1217 = vadd.f32 0.0, %v1216
          %v1218 = vpop.f32.mrb[0].mxu0
          %1219 = vmatprep.mubr.bf16.mxu0 0
          %1220 = vmatmul.mubr.bf16.gmra.mrb[0].mxu0 %v1068
          %v1221 = vpop.f32.mrb[0].mxu0
          %v1222 = vadd.f32 0.0, %v1221
          %v1223 = vpop.f32.mrb[0].mxu0
          %v1224 = vpop.f32.mrb[0].mxu0
          %v1225 = vadd.f32 0.0, %v1224
          %v1226 = vpop.f32.mrb[0].mxu0
          %1227 = vmatprep.mubr.bf16.mxu0 0
          %1228 = vmatmul.mubr.bf16.gmra.mrb[0].mxu0 %v1069
          %v1229 = vpop.f32.mrb[0].mxu0
          %v1230 = vadd.f32 0.0, %v1229
          %v1231 = vpop.f32.mrb[0].mxu0
          %v1232 = vpop.f32.mrb[0].mxu0
          %v1233 = vadd.f32 0.0, %v1232
          %v1234 = vpop.f32.mrb[0].mxu0
          %1235 = vmatprep.mubr.bf16.mxu0 0
          %1236 = vmatmul.mubr.bf16.gmra.mrb[0].mxu0 %v1070
          %v1237 = vpop.f32.mrb[0].mxu0
          %v1238 = vadd.f32 0.0, %v1237
          %v1239 = vpop.f32.mrb[0].mxu0
          %v1240 = vpop.f32.mrb[0].mxu0
          %v1241 = vadd.f32 0.0, %v1240
          %v1242 = vpop.f32.mrb[0].mxu0
          %1243 = vmatprep.mubr.bf16.mxu0 0
          %1244 = vmatmul.mubr.bf16.gmra.mrb[0].mxu0 %v1071
          %v1245 = vpop.f32.mrb[0].mxu0
          %v1246 = vadd.f32 0.0, %v1245
          %v1247 = vpop.f32.mrb[0].mxu0
          %v1248 = vpop.f32.mrb[0].mxu0
          %v1249 = vadd.f32 0.0, %v1248
          %v1250 = vpop.f32.mrb[0].mxu0
          %1251 = vmatprep.mubr.bf16.mxu0 0
          %1252 = vmatmul.mubr.bf16.gmra.mrb[0].mxu0 %v1072
          %v1253 = vpop.f32.mrb[0].mxu0
          %v1254 = vadd.f32 0.0, %v1253
          %v1255 = vpop.f32.mrb[0].mxu0
          %v1256 = vpop.f32.mrb[0].mxu0
          %v1257 = vadd.f32 0.0, %v1256
          %v1258 = vpop.f32.mrb[0].mxu0
          %1259 = vdwg.mxu0
          %v1276 = vunpack.c.l.b16 %v1099
          %v1277 = vunpack.c.l.b16 %v1100
          %v1278 = vunpack.c.l.b16 %v1101
          %v1279 = vunpack.c.l.b16 %v1102
          %v1280 = vunpack.c.l.b16 %v1103
          %v1281 = vunpack.c.l.b16 %v1104
          %v1282 = vunpack.c.l.b16 %v1105
          %v1283 = vunpack.c.l.b16 %v1106
          %v1284 = vunpack.c.l.b16 %v1107
          %v1285 = vunpack.c.l.b16 %v1108
          %v1286 = vunpack.c.l.b16 %v1109
          %v1287 = vunpack.c.l.b16 %v1110
          %v1288 = vunpack.c.l.b16 %v1111
          %v1289 = vunpack.c.l.b16 %v1112
          %v1290 = vunpack.c.l.b16 %v1113
          %v1291 = vunpack.c.l.b16 %v1114
          %v1292 = vpack.c.b16 %v1277, %v1276
          %v1293 = vpack.c.b16 %v1279, %v1278
          %v1294 = vpack.c.b16 %v1281, %v1280
          %v1295 = vpack.c.b16 %v1283, %v1282
          %v1296 = vpack.c.b16 %v1285, %v1284
          %v1297 = vpack.c.b16 %v1287, %v1286
          %v1298 = vpack.c.b16 %v1289, %v1288
          %v1299 = vpack.c.b16 %v1291, %v1290
          %1308 = vmatprep.subr.bf16.mxu0 0
          %1309 = vmatpush1.bf16.msra.mxu0 %v1292
          %1310 = vmatprep.subr.bf16.mxu0 0
          %1311 = vmatpush1.bf16.msra.mxu0 %v1293
          %1312 = vmatprep.subr.bf16.mxu0 0
          %1313 = vmatpush1.bf16.msra.mxu0 %v1294
          %1314 = vmatprep.subr.bf16.mxu0 0
          %1315 = vmatpush1.bf16.msra.mxu0 %v1295
          %1316 = vmatprep.subr.bf16.mxu0 0
          %1317 = vmatpush1.bf16.msra.mxu0 %v1296
          %1318 = vmatprep.subr.bf16.mxu0 0
          %1319 = vmatpush1.bf16.msra.mxu0 %v1297
          %1320 = vmatprep.subr.bf16.mxu0 0
          %1321 = vmatpush1.bf16.msra.mxu0 %v1298
          %1322 = vmatprep.subr.bf16.mxu0 0
          %1323 = vmatpush1.bf16.msra.mxu0 %v1299
          %1324 = vmatprep.subr.bf16.mxu0 0
          %1325 = vmatpush1.bf16.msra.mxu0 0
          %1326 = vmatprep.subr.bf16.mxu0 0
          %1327 = vmatpush1.bf16.msra.mxu0 0
          %1328 = vmatprep.subr.bf16.mxu0 0
          %1329 = vmatpush1.bf16.msra.mxu0 0
          %1330 = vmatprep.subr.bf16.mxu0 0
          %1331 = vmatpush1.bf16.msra.mxu0 0
          %1332 = vmatprep.subr.bf16.mxu0 0
          %1333 = vmatpush1.bf16.msra.mxu0 0
          %1334 = vmatprep.subr.bf16.mxu0 0
          %1335 = vmatpush1.bf16.msra.mxu0 0
          %1336 = vmatprep.subr.bf16.mxu0 0
          %1337 = vmatpush1.bf16.msra.mxu0 0
          %1338 = vmatprep.subr.bf16.mxu0 0
          %1339 = vmatpush1.bf16.msra.mxu0 0
          %1340 = vmatprep.mubr.bf16.mxu0 0
          %1341 = vmatmul.mubr.bf16.gmra.mrb[0].mxu0 %v1073
          %v1342 = vpop.f32.mrb[0].mxu0
          %v1343 = vadd.f32 0.0, %v1342
          %v1344 = vpop.f32.mrb[0].mxu0
          %v1345 = vpop.f32.mrb[0].mxu0
          %v1346 = vadd.f32 0.0, %v1345
          %v1347 = vpop.f32.mrb[0].mxu0
          %1348 = vmatprep.mubr.bf16.mxu0 0
          %1349 = vmatmul.mubr.bf16.gmra.mrb[0].mxu0 %v1074
          %v1350 = vpop.f32.mrb[0].mxu0
          %v1351 = vadd.f32 0.0, %v1350
          %v1352 = vpop.f32.mrb[0].mxu0
          %v1353 = vpop.f32.mrb[0].mxu0
          %v1354 = vadd.f32 0.0, %v1353
          %v1355 = vpop.f32.mrb[0].mxu0
          %1356 = vmatprep.mubr.bf16.mxu0 0
          %1357 = vmatmul.mubr.bf16.gmra.mrb[0].mxu0 %v1075
          %v1358 = vpop.f32.mrb[0].mxu0
          %v1359 = vadd.f32 0.0, %v1358
          %v1360 = vpop.f32.mrb[0].mxu0
          %v1361 = vpop.f32.mrb[0].mxu0
          %v1362 = vadd.f32 0.0, %v1361
          %v1363 = vpop.f32.mrb[0].mxu0
          %1364 = vmatprep.mubr.bf16.mxu0 0
          %1365 = vmatmul.mubr.bf16.gmra.mrb[0].mxu0 %v1076
          %v1366 = vpop.f32.mrb[0].mxu0
          %v1367 = vadd.f32 0.0, %v1366
          %v1368 = vpop.f32.mrb[0].mxu0
          %v1369 = vpop.f32.mrb[0].mxu0
          %v1370 = vadd.f32 0.0, %v1369
          %v1371 = vpop.f32.mrb[0].mxu0
          %1372 = vmatprep.mubr.bf16.mxu0 0
          %1373 = vmatmul.mubr.bf16.gmra.mrb[0].mxu0 %v1077
          %v1374 = vpop.f32.mrb[0].mxu0
          %v1375 = vadd.f32 0.0, %v1374
          %v1376 = vpop.f32.mrb[0].mxu0
          %v1377 = vpop.f32.mrb[0].mxu0
          %v1378 = vadd.f32 0.0, %v1377
          %v1379 = vpop.f32.mrb[0].mxu0
          %1380 = vmatprep.mubr.bf16.mxu0 0
          %1381 = vmatmul.mubr.bf16.gmra.mrb[0].mxu0 %v1078
          %v1382 = vpop.f32.mrb[0].mxu0
          %v1383 = vadd.f32 0.0, %v1382
          %v1384 = vpop.f32.mrb[0].mxu0
          %v1385 = vpop.f32.mrb[0].mxu0
          %v1386 = vadd.f32 0.0, %v1385
          %v1387 = vpop.f32.mrb[0].mxu0
          %1388 = vmatprep.mubr.bf16.mxu0 0
          %1389 = vmatmul.mubr.bf16.gmra.mrb[0].mxu0 %v1079
          %v1390 = vpop.f32.mrb[0].mxu0
          %v1391 = vadd.f32 0.0, %v1390
          %v1392 = vpop.f32.mrb[0].mxu0
          %v1393 = vpop.f32.mrb[0].mxu0
          %v1394 = vadd.f32 0.0, %v1393
          %v1395 = vpop.f32.mrb[0].mxu0
          %1396 = vmatprep.mubr.bf16.mxu0 0
          %1397 = vmatmul.mubr.bf16.gmra.mrb[0].mxu0 %v1080
          %v1398 = vpop.f32.mrb[0].mxu0
          %v1399 = vadd.f32 0.0, %v1398
          %v1400 = vpop.f32.mrb[0].mxu0
          %v1401 = vpop.f32.mrb[0].mxu0
          %v1402 = vadd.f32 0.0, %v1401
          %v1403 = vpop.f32.mrb[0].mxu0
          %1404 = vdwg.mxu0
          %v1405 = vadd.bf16 %v1065, %v1073
          %v1406 = vadd.bf16 %v1066, %v1074
          %v1407 = vadd.bf16 %v1067, %v1075
          %v1408 = vadd.bf16 %v1068, %v1076
          %v1409 = vadd.bf16 %v1069, %v1077
          %v1410 = vadd.bf16 %v1070, %v1078
          %v1411 = vadd.bf16 %v1071, %v1079
          %v1412 = vadd.bf16 %v1072, %v1080
          %v1413 = vadd.bf16 %v1082, %v1099
          %v1414 = vadd.bf16 %v1083, %v1100
          %v1415 = vadd.bf16 %v1084, %v1101
          %v1416 = vadd.bf16 %v1085, %v1102
          %v1417 = vadd.bf16 %v1086, %v1103
          %v1418 = vadd.bf16 %v1087, %v1104
          %v1419 = vadd.bf16 %v1088, %v1105
          %v1420 = vadd.bf16 %v1089, %v1106
          %v1421 = vadd.bf16 %v1090, %v1107
          %v1422 = vadd.bf16 %v1091, %v1108
          %v1423 = vadd.bf16 %v1092, %v1109
          %v1424 = vadd.bf16 %v1093, %v1110
          %v1425 = vadd.bf16 %v1094, %v1111
          %v1426 = vadd.bf16 %v1095, %v1112
          %v1427 = vadd.bf16 %v1096, %v1113
          %v1428 = vadd.bf16 %v1097, %v1114
          %v1445 = vunpack.c.l.b16 %v1413
          %v1446 = vunpack.c.l.b16 %v1414
          %v1447 = vunpack.c.l.b16 %v1415
          %v1448 = vunpack.c.l.b16 %v1416
          %v1449 = vunpack.c.l.b16 %v1417
          %v1450 = vunpack.c.l.b16 %v1418
          %v1451 = vunpack.c.l.b16 %v1419
          %v1452 = vunpack.c.l.b16 %v1420
          %v1453 = vunpack.c.l.b16 %v1421
          %v1454 = vunpack.c.l.b16 %v1422
          %v1455 = vunpack.c.l.b16 %v1423
          %v1456 = vunpack.c.l.b16 %v1424
          %v1457 = vunpack.c.l.b16 %v1425
          %v1458 = vunpack.c.l.b16 %v1426
          %v1459 = vunpack.c.l.b16 %v1427
          %v1460 = vunpack.c.l.b16 %v1428
          %v1461 = vpack.c.b16 %v1446, %v1445
          %v1462 = vpack.c.b16 %v1448, %v1447
          %v1463 = vpack.c.b16 %v1450, %v1449
          %v1464 = vpack.c.b16 %v1452, %v1451
          %v1465 = vpack.c.b16 %v1454, %v1453
          %v1466 = vpack.c.b16 %v1456, %v1455
          %v1467 = vpack.c.b16 %v1458, %v1457
          %v1468 = vpack.c.b16 %v1460, %v1459
          %1477 = vmatprep.subr.bf16.mxu0 0
          %1478 = vmatpush1.bf16.msra.mxu0 %v1461
          %1479 = vmatprep.subr.bf16.mxu0 0
          %1480 = vmatpush1.bf16.msra.mxu0 %v1462
          %1481 = vmatprep.subr.bf16.mxu0 0
          %1482 = vmatpush1.bf16.msra.mxu0 %v1463
          %1483 = vmatprep.subr.bf16.mxu0 0
          %1484 = vmatpush1.bf16.msra.mxu0 %v1464
          %1485 = vmatprep.subr.bf16.mxu0 0
          %1486 = vmatpush1.bf16.msra.mxu0 %v1465
          %1487 = vmatprep.subr.bf16.mxu0 0
          %1488 = vmatpush1.bf16.msra.mxu0 %v1466
          %1489 = vmatprep.subr.bf16.mxu0 0
          %1490 = vmatpush1.bf16.msra.mxu0 %v1467
          %1491 = vmatprep.subr.bf16.mxu0 0
          %1492 = vmatpush1.bf16.msra.mxu0 %v1468
          %1493 = vmatprep.subr.bf16.mxu0 0
          %1494 = vmatpush1.bf16.msra.mxu0 0
          %1495 = vmatprep.subr.bf16.mxu0 0
          %1496 = vmatpush1.bf16.msra.mxu0 0
          %1497 = vmatprep.subr.bf16.mxu0 0
          %1498 = vmatpush1.bf16.msra.mxu0 0
          %1499 = vmatprep.subr.bf16.mxu0 0
          %1500 = vmatpush1.bf16.msra.mxu0 0
          %1501 = vmatprep.subr.bf16.mxu0 0
          %1502 = vmatpush1.bf16.msra.mxu0 0
          %1503 = vmatprep.subr.bf16.mxu0 0
          %1504 = vmatpush1.bf16.msra.mxu0 0
          %1505 = vmatprep.subr.bf16.mxu0 0
          %1506 = vmatpush1.bf16.msra.mxu0 0
          %1507 = vmatprep.subr.bf16.mxu0 0
          %1508 = vmatpush1.bf16.msra.mxu0 0
          %1509 = vmatprep.mubr.bf16.mxu0 0
          %1510 = vmatmul.mubr.bf16.gmra.mrb[0].mxu0 %v1405
          %v1511 = vpop.f32.mrb[0].mxu0
          %v1512 = vadd.f32 0.0, %v1511
          %v1513 = vpop.f32.mrb[0].mxu0
          %v1514 = vpop.f32.mrb[0].mxu0
          %v1515 = vadd.f32 0.0, %v1514
          %v1516 = vpop.f32.mrb[0].mxu0
          %1517 = vmatprep.mubr.bf16.mxu0 0
          %1518 = vmatmul.mubr.bf16.gmra.mrb[0].mxu0 %v1406
          %v1519 = vpop.f32.mrb[0].mxu0
          %v1520 = vadd.f32 0.0, %v1519
          %v1521 = vpop.f32.mrb[0].mxu0
          %v1522 = vpop.f32.mrb[0].mxu0
          %v1523 = vadd.f32 0.0, %v1522
          %v1524 = vpop.f32.mrb[0].mxu0
          %1525 = vmatprep.mubr.bf16.mxu0 0
          %1526 = vmatmul.mubr.bf16.gmra.mrb[0].mxu0 %v1407
          %v1527 = vpop.f32.mrb[0].mxu0
          %v1528 = vadd.f32 0.0, %v1527
          %v1529 = vpop.f32.mrb[0].mxu0
          %v1530 = vpop.f32.mrb[0].mxu0
          %v1531 = vadd.f32 0.0, %v1530
          %v1532 = vpop.f32.mrb[0].mxu0
          %1533 = vmatprep.mubr.bf16.mxu0 0
          %1534 = vmatmul.mubr.bf16.gmra.mrb[0].mxu0 %v1408
          %v1535 = vpop.f32.mrb[0].mxu0
          %v1536 = vadd.f32 0.0, %v1535
          %v1537 = vpop.f32.mrb[0].mxu0
          %v1538 = vpop.f32.mrb[0].mxu0
          %v1539 = vadd.f32 0.0, %v1538
          %v1540 = vpop.f32.mrb[0].mxu0
          %1541 = vmatprep.mubr.bf16.mxu0 0
          %1542 = vmatmul.mubr.bf16.gmra.mrb[0].mxu0 %v1409
          %v1543 = vpop.f32.mrb[0].mxu0
          %v1544 = vadd.f32 0.0, %v1543
          %v1545 = vpop.f32.mrb[0].mxu0
          %v1546 = vpop.f32.mrb[0].mxu0
          %v1547 = vadd.f32 0.0, %v1546
          %v1548 = vpop.f32.mrb[0].mxu0
          %1549 = vmatprep.mubr.bf16.mxu0 0
          %1550 = vmatmul.mubr.bf16.gmra.mrb[0].mxu0 %v1410
          %v1551 = vpop.f32.mrb[0].mxu0
          %v1552 = vadd.f32 0.0, %v1551
          %v1553 = vpop.f32.mrb[0].mxu0
          %v1554 = vpop.f32.mrb[0].mxu0
          %v1555 = vadd.f32 0.0, %v1554
          %v1556 = vpop.f32.mrb[0].mxu0
          %1557 = vmatprep.mubr.bf16.mxu0 0
          %1558 = vmatmul.mubr.bf16.gmra.mrb[0].mxu0 %v1411
          %v1559 = vpop.f32.mrb[0].mxu0
          %v1560 = vadd.f32 0.0, %v1559
          %v1561 = vpop.f32.mrb[0].mxu0
          %v1562 = vpop.f32.mrb[0].mxu0
          %v1563 = vadd.f32 0.0, %v1562
          %v1564 = vpop.f32.mrb[0].mxu0
          %1565 = vmatprep.mubr.bf16.mxu0 0
          %1566 = vmatmul.mubr.bf16.gmra.mrb[0].mxu0 %v1412
          %v1567 = vpop.f32.mrb[0].mxu0
          %v1568 = vadd.f32 0.0, %v1567
          %v1569 = vpop.f32.mrb[0].mxu0
          %v1570 = vpop.f32.mrb[0].mxu0
          %v1571 = vadd.f32 0.0, %v1570
          %v1572 = vpop.f32.mrb[0].mxu0
          %1573 = vdwg.mxu0
          %v1574 = vsub.f32 %v1198, %v1343
          %v1575 = vsub.f32 %v1201, %v1346
          %v1576 = vsub.f32 %v1206, %v1351
          %v1577 = vsub.f32 %v1209, %v1354
          %v1578 = vsub.f32 %v1214, %v1359
          %v1579 = vsub.f32 %v1217, %v1362
          %v1580 = vsub.f32 %v1222, %v1367
          %v1581 = vsub.f32 %v1225, %v1370
          %v1582 = vsub.f32 %v1230, %v1375
          %v1583 = vsub.f32 %v1233, %v1378
          %v1584 = vsub.f32 %v1238, %v1383
          %v1585 = vsub.f32 %v1241, %v1386
          %v1586 = vsub.f32 %v1246, %v1391
          %v1587 = vsub.f32 %v1249, %v1394
          %v1588 = vsub.f32 %v1254, %v1399
          %v1589 = vsub.f32 %v1257, %v1402
          %v1590 = vsub.f32 %v1512, %v1198
          %v1591 = vsub.f32 %v1515, %v1201
          %v1592 = vsub.f32 %v1520, %v1206
          %v1593 = vsub.f32 %v1523, %v1209
          %v1594 = vsub.f32 %v1528, %v1214
          %v1595 = vsub.f32 %v1531, %v1217
          %v1596 = vsub.f32 %v1536, %v1222
          %v1597 = vsub.f32 %v1539, %v1225
          %v1598 = vsub.f32 %v1544, %v1230
          %v1599 = vsub.f32 %v1547, %v1233
          %v1600 = vsub.f32 %v1552, %v1238
          %v1601 = vsub.f32 %v1555, %v1241
          %v1602 = vsub.f32 %v1560, %v1246
          %v1603 = vsub.f32 %v1563, %v1249
          %v1604 = vsub.f32 %v1568, %v1254
          %v1605 = vsub.f32 %v1571, %v1257
          %v1606 = vsub.f32 %v1590, %v1343
          %v1607 = vsub.f32 %v1591, %v1346
          %v1608 = vsub.f32 %v1592, %v1351
          %v1609 = vsub.f32 %v1593, %v1354
          %v1610 = vsub.f32 %v1594, %v1359
          %v1611 = vsub.f32 %v1595, %v1362
          %v1612 = vsub.f32 %v1596, %v1367
          %v1613 = vsub.f32 %v1597, %v1370
          %v1614 = vsub.f32 %v1598, %v1375
          %v1615 = vsub.f32 %v1599, %v1378
          %v1616 = vsub.f32 %v1600, %v1383
          %v1617 = vsub.f32 %v1601, %v1386
          %v1618 = vsub.f32 %v1602, %v1391
          %v1619 = vsub.f32 %v1603, %v1394
          %v1620 = vsub.f32 %v1604, %v1399
          %v1621 = vsub.f32 %v1605, %v1402
          %v1622 = vld [vmem:[#allocation8] sm:$0xff]
          %v1623 = vld [vmem:[#allocation8 + $0x8] sm:$0xff]
          %v1624 = vld [vmem:[#allocation8 + $0x10] sm:$0xff]
          %v1625 = vld [vmem:[#allocation8 + $0x18] sm:$0xff]
          %v1626 = vld [vmem:[#allocation8 + $0x20] sm:$0xff]
          %v1627 = vld [vmem:[#allocation8 + $0x28] sm:$0xff]
          %v1628 = vld [vmem:[#allocation8 + $0x30] sm:$0xff]
          %v1629 = vld [vmem:[#allocation8 + $0x38] sm:$0xff]
          %v1630 = vld [vmem:[#allocation8 + $0x40] sm:$0xff]
          %v1631 = vld [vmem:[#allocation8 + $0x48] sm:$0xff]
          %v1632 = vld [vmem:[#allocation8 + $0x50] sm:$0xff]
          %v1633 = vld [vmem:[#allocation8 + $0x58] sm:$0xff]
          %v1634 = vld [vmem:[#allocation8 + $0x60] sm:$0xff]
          %v1635 = vld [vmem:[#allocation8 + $0x68] sm:$0xff]
          %v1636 = vld [vmem:[#allocation8 + $0x70] sm:$0xff]
          %v1637 = vld [vmem:[#allocation8 + $0x78] sm:$0xff]
          %v1638 = vmul.f32 %v1622, %v1574
          %v1639 = vmul.f32 %v1623, %v1575
          %v1640 = vmul.f32 %v1624, %v1576
          %v1641 = vmul.f32 %v1625, %v1577
          %v1642 = vmul.f32 %v1626, %v1578
          %v1643 = vmul.f32 %v1627, %v1579
          %v1644 = vmul.f32 %v1628, %v1580
          %v1645 = vmul.f32 %v1629, %v1581
          %v1646 = vmul.f32 %v1630, %v1582
          %v1647 = vmul.f32 %v1631, %v1583
          %v1648 = vmul.f32 %v1632, %v1584
          %v1649 = vmul.f32 %v1633, %v1585
          %v1650 = vmul.f32 %v1634, %v1586
          %v1651 = vmul.f32 %v1635, %v1587
          %v1652 = vmul.f32 %v1636, %v1588
          %v1653 = vmul.f32 %v1637, %v1589
          %s1654 = scalar_lea.vmem [#allocation8], 128
          %v1655 = vld [vmem:[%s1654] sm:$0xff]
          %v1656 = vld [vmem:[%s1654 + $0x8] sm:$0xff]
          %v1657 = vld [vmem:[%s1654 + $0x10] sm:$0xff]
          %v1658 = vld [vmem:[%s1654 + $0x18] sm:$0xff]
          %v1659 = vld [vmem:[%s1654 + $0x20] sm:$0xff]
          %v1660 = vld [vmem:[%s1654 + $0x28] sm:$0xff]
          %v1661 = vld [vmem:[%s1654 + $0x30] sm:$0xff]
          %v1662 = vld [vmem:[%s1654 + $0x38] sm:$0xff]
          %v1663 = vld [vmem:[%s1654 + $0x40] sm:$0xff]
          %v1664 = vld [vmem:[%s1654 + $0x48] sm:$0xff]
          %v1665 = vld [vmem:[%s1654 + $0x50] sm:$0xff]
          %v1666 = vld [vmem:[%s1654 + $0x58] sm:$0xff]
          %v1667 = vld [vmem:[%s1654 + $0x60] sm:$0xff]
          %v1668 = vld [vmem:[%s1654 + $0x68] sm:$0xff]
          %v1669 = vld [vmem:[%s1654 + $0x70] sm:$0xff]
          %v1670 = vld [vmem:[%s1654 + $0x78] sm:$0xff]
          %v1671 = vmul.f32 %v1655, %v1606
          %v1672 = vmul.f32 %v1656, %v1607
          %v1673 = vmul.f32 %v1657, %v1608
          %v1674 = vmul.f32 %v1658, %v1609
          %v1675 = vmul.f32 %v1659, %v1610
          %v1676 = vmul.f32 %v1660, %v1611
          %v1677 = vmul.f32 %v1661, %v1612
          %v1678 = vmul.f32 %v1662, %v1613
          %v1679 = vmul.f32 %v1663, %v1614
          %v1680 = vmul.f32 %v1664, %v1615
          %v1681 = vmul.f32 %v1665, %v1616
          %v1682 = vmul.f32 %v1666, %v1617
          %v1683 = vmul.f32 %v1667, %v1618
          %v1684 = vmul.f32 %v1668, %v1619
          %v1685 = vmul.f32 %v1669, %v1620
          %v1686 = vmul.f32 %v1670, %v1621
          %v1687 = vsub.f32 %v1638, %v1671
          %v1688 = vsub.f32 %v1639, %v1672
          %v1689 = vsub.f32 %v1640, %v1673
          %v1690 = vsub.f32 %v1641, %v1674
          %v1691 = vsub.f32 %v1642, %v1675
          %v1692 = vsub.f32 %v1643, %v1676
          %v1693 = vsub.f32 %v1644, %v1677
          %v1694 = vsub.f32 %v1645, %v1678
          %v1695 = vsub.f32 %v1646, %v1679
          %v1696 = vsub.f32 %v1647, %v1680
          %v1697 = vsub.f32 %v1648, %v1681
          %v1698 = vsub.f32 %v1649, %v1682
          %v1699 = vsub.f32 %v1650, %v1683
          %v1700 = vsub.f32 %v1651, %v1684
          %v1701 = vsub.f32 %v1652, %v1685
          %v1702 = vsub.f32 %v1653, %v1686
          %v1703 = vmul.f32 %v1622, %v1606
          %v1704 = vmul.f32 %v1623, %v1607
          %v1705 = vmul.f32 %v1624, %v1608
          %v1706 = vmul.f32 %v1625, %v1609
          %v1707 = vmul.f32 %v1626, %v1610
          %v1708 = vmul.f32 %v1627, %v1611
          %v1709 = vmul.f32 %v1628, %v1612
          %v1710 = vmul.f32 %v1629, %v1613
          %v1711 = vmul.f32 %v1630, %v1614
          %v1712 = vmul.f32 %v1631, %v1615
          %v1713 = vmul.f32 %v1632, %v1616
          %v1714 = vmul.f32 %v1633, %v1617
          %v1715 = vmul.f32 %v1634, %v1618
          %v1716 = vmul.f32 %v1635, %v1619
          %v1717 = vmul.f32 %v1636, %v1620
          %v1718 = vmul.f32 %v1637, %v1621
          %v1719 = vmul.f32 %v1655, %v1574
          %v1720 = vmul.f32 %v1656, %v1575
          %v1721 = vmul.f32 %v1657, %v1576
          %v1722 = vmul.f32 %v1658, %v1577
          %v1723 = vmul.f32 %v1659, %v1578
          %v1724 = vmul.f32 %v1660, %v1579
          %v1725 = vmul.f32 %v1661, %v1580
          %v1726 = vmul.f32 %v1662, %v1581
          %v1727 = vmul.f32 %v1663, %v1582
          %v1728 = vmul.f32 %v1664, %v1583
          %v1729 = vmul.f32 %v1665, %v1584
          %v1730 = vmul.f32 %v1666, %v1585
          %v1731 = vmul.f32 %v1667, %v1586
          %v1732 = vmul.f32 %v1668, %v1587
          %v1733 = vmul.f32 %v1669, %v1588
          %v1734 = vmul.f32 %v1670, %v1589
          %v1735 = vadd.f32 %v1703, %v1719
          %v1736 = vadd.f32 %v1704, %v1720
          %v1737 = vadd.f32 %v1705, %v1721
          %v1738 = vadd.f32 %v1706, %v1722
          %v1739 = vadd.f32 %v1707, %v1723
          %v1740 = vadd.f32 %v1708, %v1724
          %v1741 = vadd.f32 %v1709, %v1725
          %v1742 = vadd.f32 %v1710, %v1726
          %v1743 = vadd.f32 %v1711, %v1727
          %v1744 = vadd.f32 %v1712, %v1728
          %v1745 = vadd.f32 %v1713, %v1729
          %v1746 = vadd.f32 %v1714, %v1730
          %v1747 = vadd.f32 %v1715, %v1731
          %v1748 = vadd.f32 %v1716, %v1732
          %v1749 = vadd.f32 %v1717, %v1733
          %v1750 = vadd.f32 %v1718, %v1734
          %s1751 = scalar_lea.vmem [#allocation7], 256
          %v1752 = vld [vmem:[%s1751] sm:$0xf]
          %v1753 = vld [vmem:[%s1751 + $0x4] sm:$0xf]
          %v1754 = vld [vmem:[%s1751 + $0x8] sm:$0xf]
          %v1755 = vld [vmem:[%s1751 + $0xc] sm:$0xf]
          %v1756 = vld [vmem:[%s1751 + $0x10] sm:$0xf]
          %v1757 = vld [vmem:[%s1751 + $0x14] sm:$0xf]
          %v1758 = vld [vmem:[%s1751 + $0x18] sm:$0xf]
          %v1759 = vld [vmem:[%s1751 + $0x1c] sm:$0xf]
          %v1760 = vld [vmem:[%s1751 + $0x20] sm:$0xf]
          %v1761 = vld [vmem:[%s1751 + $0x24] sm:$0xf]
          %v1762 = vld [vmem:[%s1751 + $0x28] sm:$0xf]
          %v1763 = vld [vmem:[%s1751 + $0x2c] sm:$0xf]
          %v1764 = vld [vmem:[%s1751 + $0x30] sm:$0xf]
          %v1765 = vld [vmem:[%s1751 + $0x34] sm:$0xf]
          %v1766 = vld [vmem:[%s1751 + $0x38] sm:$0xf]
          %v1767 = vld [vmem:[%s1751 + $0x3c] sm:$0xf]
          %s1768 = scalar_lea.vmem [#allocation7], 320
          %v1769 = vld [vmem:[%s1768] sm:$0xf]
          %v1770 = vld [vmem:[%s1768 + $0x4] sm:$0xf]
          %v1771 = vld [vmem:[%s1768 + $0x8] sm:$0xf]
          %v1772 = vld [vmem:[%s1768 + $0xc] sm:$0xf]
          %v1773 = vld [vmem:[%s1768 + $0x10] sm:$0xf]
          %v1774 = vld [vmem:[%s1768 + $0x14] sm:$0xf]
          %v1775 = vld [vmem:[%s1768 + $0x18] sm:$0xf]
          %v1776 = vld [vmem:[%s1768 + $0x1c] sm:$0xf]
          %v1777 = vld [vmem:[%s1768 + $0x20] sm:$0xf]
          %v1778 = vld [vmem:[%s1768 + $0x24] sm:$0xf]
          %v1779 = vld [vmem:[%s1768 + $0x28] sm:$0xf]
          %v1780 = vld [vmem:[%s1768 + $0x2c] sm:$0xf]
          %v1781 = vld [vmem:[%s1768 + $0x30] sm:$0xf]
          %v1782 = vld [vmem:[%s1768 + $0x34] sm:$0xf]
          %v1783 = vld [vmem:[%s1768 + $0x38] sm:$0xf]
          %v1784 = vld [vmem:[%s1768 + $0x3c] sm:$0xf]
          %v1785 = vpack.c.bf16 %v1688, %v1687
          %v1786 = vpack.c.bf16 %v1690, %v1689
          %v1787 = vpack.c.bf16 %v1692, %v1691
          %v1788 = vpack.c.bf16 %v1694, %v1693
          %v1789 = vpack.c.bf16 %v1696, %v1695
          %v1790 = vpack.c.bf16 %v1698, %v1697
          %v1791 = vpack.c.bf16 %v1700, %v1699
          %v1792 = vpack.c.bf16 %v1702, %v1701
          %v1793 = vpack.c.bf16 %v1736, %v1735
          %v1794 = vpack.c.bf16 %v1738, %v1737
          %v1795 = vpack.c.bf16 %v1740, %v1739
          %v1796 = vpack.c.bf16 %v1742, %v1741
          %v1797 = vpack.c.bf16 %v1744, %v1743
          %v1798 = vpack.c.bf16 %v1746, %v1745
          %v1799 = vpack.c.bf16 %v1748, %v1747
          %v1800 = vpack.c.bf16 %v1750, %v1749
          %v1817 = vunpack.c.l.b16 %v1752
          %v1818 = vunpack.c.l.b16 %v1753
          %v1819 = vunpack.c.l.b16 %v1754
          %v1820 = vunpack.c.l.b16 %v1755
          %v1821 = vunpack.c.l.b16 %v1756
          %v1822 = vunpack.c.l.b16 %v1757
          %v1823 = vunpack.c.l.b16 %v1758
          %v1824 = vunpack.c.l.b16 %v1759
          %v1825 = vunpack.c.l.b16 %v1760
          %v1826 = vunpack.c.l.b16 %v1761
          %v1827 = vunpack.c.l.b16 %v1762
          %v1828 = vunpack.c.l.b16 %v1763
          %v1829 = vunpack.c.l.b16 %v1764
          %v1830 = vunpack.c.l.b16 %v1765
          %v1831 = vunpack.c.l.b16 %v1766
          %v1832 = vunpack.c.l.b16 %v1767
          %v1833 = vpack.c.b16 %v1818, %v1817
          %v1834 = vpack.c.b16 %v1820, %v1819
          %v1835 = vpack.c.b16 %v1822, %v1821
          %v1836 = vpack.c.b16 %v1824, %v1823
          %v1837 = vpack.c.b16 %v1826, %v1825
          %v1838 = vpack.c.b16 %v1828, %v1827
          %v1839 = vpack.c.b16 %v1830, %v1829
          %v1840 = vpack.c.b16 %v1832, %v1831
          %1849 = vmatprep.subr.bf16.mxu0 0
          %1850 = vmatpush1.bf16.msra.mxu0 %v1785
          %1851 = vmatprep.subr.bf16.mxu0 0
          %1852 = vmatpush1.bf16.msra.mxu0 %v1786
          %1853 = vmatprep.subr.bf16.mxu0 0
          %1854 = vmatpush1.bf16.msra.mxu0 %v1787
          %1855 = vmatprep.subr.bf16.mxu0 0
          %1856 = vmatpush1.bf16.msra.mxu0 %v1788
          %1857 = vmatprep.subr.bf16.mxu0 0
          %1858 = vmatpush1.bf16.msra.mxu0 %v1789
          %1859 = vmatprep.subr.bf16.mxu0 0
          %1860 = vmatpush1.bf16.msra.mxu0 %v1790
          %1861 = vmatprep.subr.bf16.mxu0 0
          %1862 = vmatpush1.bf16.msra.mxu0 %v1791
          %1863 = vmatprep.subr.bf16.mxu0 0
          %1864 = vmatpush1.bf16.msra.mxu0 %v1792
          %1865 = vmatprep.subr.bf16.mxu0 0
          %1866 = vmatpush1.bf16.msra.mxu0 0
          %1867 = vmatprep.subr.bf16.mxu0 0
          %1868 = vmatpush1.bf16.msra.mxu0 0
          %1869 = vmatprep.subr.bf16.mxu0 0
          %1870 = vmatpush1.bf16.msra.mxu0 0
          %1871 = vmatprep.subr.bf16.mxu0 0
          %1872 = vmatpush1.bf16.msra.mxu0 0
          %1873 = vmatprep.subr.bf16.mxu0 0
          %1874 = vmatpush1.bf16.msra.mxu0 0
          %1875 = vmatprep.subr.bf16.mxu0 0
          %1876 = vmatpush1.bf16.msra.mxu0 0
          %1877 = vmatprep.subr.bf16.mxu0 0
          %1878 = vmatpush1.bf16.msra.mxu0 0
          %1879 = vmatprep.subr.bf16.mxu0 0
          %1880 = vmatpush1.bf16.msra.mxu0 0
          %1881 = vmatprep.mubr.bf16.mxu0 0
          %1882 = vmatmul.mubr.bf16.gmra.mrb[0].mxu0 %v1833
          %v1883 = vpop.f32.mrb[0].mxu0
          %v1884 = vadd.f32 0.0, %v1883
          %v1885 = vpop.f32.mrb[0].mxu0
          %v1886 = vpop.f32.mrb[0].mxu0
          %v1887 = vadd.f32 0.0, %v1886
          %v1888 = vpop.f32.mrb[0].mxu0
          %1889 = vmatprep.mubr.bf16.mxu0 0
          %1890 = vmatmul.mubr.bf16.gmra.mrb[0].mxu0 %v1834
          %v1891 = vpop.f32.mrb[0].mxu0
          %v1892 = vadd.f32 0.0, %v1891
          %v1893 = vpop.f32.mrb[0].mxu0
          %v1894 = vpop.f32.mrb[0].mxu0
          %v1895 = vadd.f32 0.0, %v1894
          %v1896 = vpop.f32.mrb[0].mxu0
          %1897 = vmatprep.mubr.bf16.mxu0 0
          %1898 = vmatmul.mubr.bf16.gmra.mrb[0].mxu0 %v1835
          %v1899 = vpop.f32.mrb[0].mxu0
          %v1900 = vadd.f32 0.0, %v1899
          %v1901 = vpop.f32.mrb[0].mxu0
          %v1902 = vpop.f32.mrb[0].mxu0
          %v1903 = vadd.f32 0.0, %v1902
          %v1904 = vpop.f32.mrb[0].mxu0
          %1905 = vmatprep.mubr.bf16.mxu0 0
          %1906 = vmatmul.mubr.bf16.gmra.mrb[0].mxu0 %v1836
          %v1907 = vpop.f32.mrb[0].mxu0
          %v1908 = vadd.f32 0.0, %v1907
          %v1909 = vpop.f32.mrb[0].mxu0
          %v1910 = vpop.f32.mrb[0].mxu0
          %v1911 = vadd.f32 0.0, %v1910
          %v1912 = vpop.f32.mrb[0].mxu0
          %1913 = vmatprep.mubr.bf16.mxu0 0
          %1914 = vmatmul.mubr.bf16.gmra.mrb[0].mxu0 %v1837
          %v1915 = vpop.f32.mrb[0].mxu0
          %v1916 = vadd.f32 0.0, %v1915
          %v1917 = vpop.f32.mrb[0].mxu0
          %v1918 = vpop.f32.mrb[0].mxu0
          %v1919 = vadd.f32 0.0, %v1918
          %v1920 = vpop.f32.mrb[0].mxu0
          %1921 = vmatprep.mubr.bf16.mxu0 0
          %1922 = vmatmul.mubr.bf16.gmra.mrb[0].mxu0 %v1838
          %v1923 = vpop.f32.mrb[0].mxu0
          %v1924 = vadd.f32 0.0, %v1923
          %v1925 = vpop.f32.mrb[0].mxu0
          %v1926 = vpop.f32.mrb[0].mxu0
          %v1927 = vadd.f32 0.0, %v1926
          %v1928 = vpop.f32.mrb[0].mxu0
          %1929 = vmatprep.mubr.bf16.mxu0 0
          %1930 = vmatmul.mubr.bf16.gmra.mrb[0].mxu0 %v1839
          %v1931 = vpop.f32.mrb[0].mxu0
          %v1932 = vadd.f32 0.0, %v1931
          %v1933 = vpop.f32.mrb[0].mxu0
          %v1934 = vpop.f32.mrb[0].mxu0
          %v1935 = vadd.f32 0.0, %v1934
          %v1936 = vpop.f32.mrb[0].mxu0
          %1937 = vmatprep.mubr.bf16.mxu0 0
          %1938 = vmatmul.mubr.bf16.gmra.mrb[0].mxu0 %v1840
          %v1939 = vpop.f32.mrb[0].mxu0
          %v1940 = vadd.f32 0.0, %v1939
          %v1941 = vpop.f32.mrb[0].mxu0
          %v1942 = vpop.f32.mrb[0].mxu0
          %v1943 = vadd.f32 0.0, %v1942
          %v1944 = vpop.f32.mrb[0].mxu0
          %1945 = vdwg.mxu0
          %v1962 = vunpack.c.l.b16 %v1769
          %v1963 = vunpack.c.l.b16 %v1770
          %v1964 = vunpack.c.l.b16 %v1771
          %v1965 = vunpack.c.l.b16 %v1772
          %v1966 = vunpack.c.l.b16 %v1773
          %v1967 = vunpack.c.l.b16 %v1774
          %v1968 = vunpack.c.l.b16 %v1775
          %v1969 = vunpack.c.l.b16 %v1776
          %v1970 = vunpack.c.l.b16 %v1777
          %v1971 = vunpack.c.l.b16 %v1778
          %v1972 = vunpack.c.l.b16 %v1779
          %v1973 = vunpack.c.l.b16 %v1780
          %v1974 = vunpack.c.l.b16 %v1781
          %v1975 = vunpack.c.l.b16 %v1782
          %v1976 = vunpack.c.l.b16 %v1783
          %v1977 = vunpack.c.l.b16 %v1784
          %v1978 = vpack.c.b16 %v1963, %v1962
          %v1979 = vpack.c.b16 %v1965, %v1964
          %v1980 = vpack.c.b16 %v1967, %v1966
          %v1981 = vpack.c.b16 %v1969, %v1968
          %v1982 = vpack.c.b16 %v1971, %v1970
          %v1983 = vpack.c.b16 %v1973, %v1972
          %v1984 = vpack.c.b16 %v1975, %v1974
          %v1985 = vpack.c.b16 %v1977, %v1976
          %1994 = vmatprep.subr.bf16.mxu0 0
          %1995 = vmatpush1.bf16.msra.mxu0 %v1793
          %1996 = vmatprep.subr.bf16.mxu0 0
          %1997 = vmatpush1.bf16.msra.mxu0 %v1794
          %1998 = vmatprep.subr.bf16.mxu0 0
          %1999 = vmatpush1.bf16.msra.mxu0 %v1795
          %2000 = vmatprep.subr.bf16.mxu0 0
          %2001 = vmatpush1.bf16.msra.mxu0 %v1796
          %2002 = vmatprep.subr.bf16.mxu0 0
          %2003 = vmatpush1.bf16.msra.mxu0 %v1797
          %2004 = vmatprep.subr.bf16.mxu0 0
          %2005 = vmatpush1.bf16.msra.mxu0 %v1798
          %2006 = vmatprep.subr.bf16.mxu0 0
          %2007 = vmatpush1.bf16.msra.mxu0 %v1799
          %2008 = vmatprep.subr.bf16.mxu0 0
          %2009 = vmatpush1.bf16.msra.mxu0 %v1800
          %2010 = vmatprep.subr.bf16.mxu0 0
          %2011 = vmatpush1.bf16.msra.mxu0 0
          %2012 = vmatprep.subr.bf16.mxu0 0
          %2013 = vmatpush1.bf16.msra.mxu0 0
          %2014 = vmatprep.subr.bf16.mxu0 0
          %2015 = vmatpush1.bf16.msra.mxu0 0
          %2016 = vmatprep.subr.bf16.mxu0 0
          %2017 = vmatpush1.bf16.msra.mxu0 0
          %2018 = vmatprep.subr.bf16.mxu0 0
          %2019 = vmatpush1.bf16.msra.mxu0 0
          %2020 = vmatprep.subr.bf16.mxu0 0
          %2021 = vmatpush1.bf16.msra.mxu0 0
          %2022 = vmatprep.subr.bf16.mxu0 0
          %2023 = vmatpush1.bf16.msra.mxu0 0
          %2024 = vmatprep.subr.bf16.mxu0 0
          %2025 = vmatpush1.bf16.msra.mxu0 0
          %2026 = vmatprep.mubr.bf16.mxu0 0
          %2027 = vmatmul.mubr.bf16.gmra.mrb[0].mxu0 %v1978
          %v2028 = vpop.f32.mrb[0].mxu0
          %v2029 = vadd.f32 0.0, %v2028
          %v2030 = vpop.f32.mrb[0].mxu0
          %v2031 = vpop.f32.mrb[0].mxu0
          %v2032 = vadd.f32 0.0, %v2031
          %v2033 = vpop.f32.mrb[0].mxu0
          %2034 = vmatprep.mubr.bf16.mxu0 0
          %2035 = vmatmul.mubr.bf16.gmra.mrb[0].mxu0 %v1979
          %v2036 = vpop.f32.mrb[0].mxu0
          %v2037 = vadd.f32 0.0, %v2036
          %v2038 = vpop.f32.mrb[0].mxu0
          %v2039 = vpop.f32.mrb[0].mxu0
          %v2040 = vadd.f32 0.0, %v2039
          %v2041 = vpop.f32.mrb[0].mxu0
          %2042 = vmatprep.mubr.bf16.mxu0 0
          %2043 = vmatmul.mubr.bf16.gmra.mrb[0].mxu0 %v1980
          %v2044 = vpop.f32.mrb[0].mxu0
          %v2045 = vadd.f32 0.0, %v2044
          %v2046 = vpop.f32.mrb[0].mxu0
          %v2047 = vpop.f32.mrb[0].mxu0
          %v2048 = vadd.f32 0.0, %v2047
          %v2049 = vpop.f32.mrb[0].mxu0
          %2050 = vmatprep.mubr.bf16.mxu0 0
          %2051 = vmatmul.mubr.bf16.gmra.mrb[0].mxu0 %v1981
          %v2052 = vpop.f32.mrb[0].mxu0
          %v2053 = vadd.f32 0.0, %v2052
          %v2054 = vpop.f32.mrb[0].mxu0
          %v2055 = vpop.f32.mrb[0].mxu0
          %v2056 = vadd.f32 0.0, %v2055
          %v2057 = vpop.f32.mrb[0].mxu0
          %2058 = vmatprep.mubr.bf16.mxu0 0
          %2059 = vmatmul.mubr.bf16.gmra.mrb[0].mxu0 %v1982
          %v2060 = vpop.f32.mrb[0].mxu0
          %v2061 = vadd.f32 0.0, %v2060
          %v2062 = vpop.f32.mrb[0].mxu0
          %v2063 = vpop.f32.mrb[0].mxu0
          %v2064 = vadd.f32 0.0, %v2063
          %v2065 = vpop.f32.mrb[0].mxu0
          %2066 = vmatprep.mubr.bf16.mxu0 0
          %2067 = vmatmul.mubr.bf16.gmra.mrb[0].mxu0 %v1983
          %v2068 = vpop.f32.mrb[0].mxu0
          %v2069 = vadd.f32 0.0, %v2068
          %v2070 = vpop.f32.mrb[0].mxu0
          %v2071 = vpop.f32.mrb[0].mxu0
          %v2072 = vadd.f32 0.0, %v2071
          %v2073 = vpop.f32.mrb[0].mxu0
          %2074 = vmatprep.mubr.bf16.mxu0 0
          %2075 = vmatmul.mubr.bf16.gmra.mrb[0].mxu0 %v1984
          %v2076 = vpop.f32.mrb[0].mxu0
          %v2077 = vadd.f32 0.0, %v2076
          %v2078 = vpop.f32.mrb[0].mxu0
          %v2079 = vpop.f32.mrb[0].mxu0
          %v2080 = vadd.f32 0.0, %v2079
          %v2081 = vpop.f32.mrb[0].mxu0
          %2082 = vmatprep.mubr.bf16.mxu0 0
          %2083 = vmatmul.mubr.bf16.gmra.mrb[0].mxu0 %v1985
          %v2084 = vpop.f32.mrb[0].mxu0
          %v2085 = vadd.f32 0.0, %v2084
          %v2086 = vpop.f32.mrb[0].mxu0
          %v2087 = vpop.f32.mrb[0].mxu0
          %v2088 = vadd.f32 0.0, %v2087
          %v2089 = vpop.f32.mrb[0].mxu0
          %2090 = vdwg.mxu0
          %v2091 = vadd.bf16 %v1752, %v1769
          %v2092 = vadd.bf16 %v1753, %v1770
          %v2093 = vadd.bf16 %v1754, %v1771
          %v2094 = vadd.bf16 %v1755, %v1772
          %v2095 = vadd.bf16 %v1756, %v1773
          %v2096 = vadd.bf16 %v1757, %v1774
          %v2097 = vadd.bf16 %v1758, %v1775
          %v2098 = vadd.bf16 %v1759, %v1776
          %v2099 = vadd.bf16 %v1760, %v1777
          %v2100 = vadd.bf16 %v1761, %v1778
          %v2101 = vadd.bf16 %v1762, %v1779
          %v2102 = vadd.bf16 %v1763, %v1780
          %v2103 = vadd.bf16 %v1764, %v1781
          %v2104 = vadd.bf16 %v1765, %v1782
          %v2105 = vadd.bf16 %v1766, %v1783
          %v2106 = vadd.bf16 %v1767, %v1784
          %v2107 = vadd.bf16 %v1785, %v1793
          %v2108 = vadd.bf16 %v1786, %v1794
          %v2109 = vadd.bf16 %v1787, %v1795
          %v2110 = vadd.bf16 %v1788, %v1796
          %v2111 = vadd.bf16 %v1789, %v1797
          %v2112 = vadd.bf16 %v1790, %v1798
          %v2113 = vadd.bf16 %v1791, %v1799
          %v2114 = vadd.bf16 %v1792, %v1800
          %v2131 = vunpack.c.l.b16 %v2091
          %v2132 = vunpack.c.l.b16 %v2092
          %v2133 = vunpack.c.l.b16 %v2093
          %v2134 = vunpack.c.l.b16 %v2094
          %v2135 = vunpack.c.l.b16 %v2095
          %v2136 = vunpack.c.l.b16 %v2096
          %v2137 = vunpack.c.l.b16 %v2097
          %v2138 = vunpack.c.l.b16 %v2098
          %v2139 = vunpack.c.l.b16 %v2099
          %v2140 = vunpack.c.l.b16 %v2100
          %v2141 = vunpack.c.l.b16 %v2101
          %v2142 = vunpack.c.l.b16 %v2102
          %v2143 = vunpack.c.l.b16 %v2103
          %v2144 = vunpack.c.l.b16 %v2104
          %v2145 = vunpack.c.l.b16 %v2105
          %v2146 = vunpack.c.l.b16 %v2106
          %v2147 = vpack.c.b16 %v2132, %v2131
          %v2148 = vpack.c.b16 %v2134, %v2133
          %v2149 = vpack.c.b16 %v2136, %v2135
          %v2150 = vpack.c.b16 %v2138, %v2137
          %v2151 = vpack.c.b16 %v2140, %v2139
          %v2152 = vpack.c.b16 %v2142, %v2141
          %v2153 = vpack.c.b16 %v2144, %v2143
          %v2154 = vpack.c.b16 %v2146, %v2145
          %2163 = vmatprep.subr.bf16.mxu0 0
          %2164 = vmatpush1.bf16.msra.mxu0 %v2107
          %2165 = vmatprep.subr.bf16.mxu0 0
          %2166 = vmatpush1.bf16.msra.mxu0 %v2108
          %2167 = vmatprep.subr.bf16.mxu0 0
          %2168 = vmatpush1.bf16.msra.mxu0 %v2109
          %2169 = vmatprep.subr.bf16.mxu0 0
          %2170 = vmatpush1.bf16.msra.mxu0 %v2110
          %2171 = vmatprep.subr.bf16.mxu0 0
          %2172 = vmatpush1.bf16.msra.mxu0 %v2111
          %2173 = vmatprep.subr.bf16.mxu0 0
          %2174 = vmatpush1.bf16.msra.mxu0 %v2112
          %2175 = vmatprep.subr.bf16.mxu0 0
          %2176 = vmatpush1.bf16.msra.mxu0 %v2113
          %2177 = vmatprep.subr.bf16.mxu0 0
          %2178 = vmatpush1.bf16.msra.mxu0 %v2114
          %2179 = vmatprep.subr.bf16.mxu0 0
          %2180 = vmatpush1.bf16.msra.mxu0 0
          %2181 = vmatprep.subr.bf16.mxu0 0
          %2182 = vmatpush1.bf16.msra.mxu0 0
          %2183 = vmatprep.subr.bf16.mxu0 0
          %2184 = vmatpush1.bf16.msra.mxu0 0
          %2185 = vmatprep.subr.bf16.mxu0 0
          %2186 = vmatpush1.bf16.msra.mxu0 0
          %2187 = vmatprep.subr.bf16.mxu0 0
          %2188 = vmatpush1.bf16.msra.mxu0 0
          %2189 = vmatprep.subr.bf16.mxu0 0
          %2190 = vmatpush1.bf16.msra.mxu0 0
          %2191 = vmatprep.subr.bf16.mxu0 0
          %2192 = vmatpush1.bf16.msra.mxu0 0
          %2193 = vmatprep.subr.bf16.mxu0 0
          %2194 = vmatpush1.bf16.msra.mxu0 0
          %2195 = vmatprep.mubr.bf16.mxu0 0
          %2196 = vmatmul.mubr.bf16.gmra.mrb[0].mxu0 %v2147
          %v2197 = vpop.f32.mrb[0].mxu0
          %v2198 = vadd.f32 0.0, %v2197
          %v2199 = vpop.f32.mrb[0].mxu0
          %v2200 = vpop.f32.mrb[0].mxu0
          %v2201 = vadd.f32 0.0, %v2200
          %v2202 = vpop.f32.mrb[0].mxu0
          %2203 = vmatprep.mubr.bf16.mxu0 0
          %2204 = vmatmul.mubr.bf16.gmra.mrb[0].mxu0 %v2148
          %v2205 = vpop.f32.mrb[0].mxu0
          %v2206 = vadd.f32 0.0, %v2205
          %v2207 = vpop.f32.mrb[0].mxu0
          %v2208 = vpop.f32.mrb[0].mxu0
          %v2209 = vadd.f32 0.0, %v2208
          %v2210 = vpop.f32.mrb[0].mxu0
          %2211 = vmatprep.mubr.bf16.mxu0 0
          %2212 = vmatmul.mubr.bf16.gmra.mrb[0].mxu0 %v2149
          %v2213 = vpop.f32.mrb[0].mxu0
          %v2214 = vadd.f32 0.0, %v2213
          %v2215 = vpop.f32.mrb[0].mxu0
          %v2216 = vpop.f32.mrb[0].mxu0
          %v2217 = vadd.f32 0.0, %v2216
          %v2218 = vpop.f32.mrb[0].mxu0
          %2219 = vmatprep.mubr.bf16.mxu0 0
          %2220 = vmatmul.mubr.bf16.gmra.mrb[0].mxu0 %v2150
          %v2221 = vpop.f32.mrb[0].mxu0
          %v2222 = vadd.f32 0.0, %v2221
          %v2223 = vpop.f32.mrb[0].mxu0
          %v2224 = vpop.f32.mrb[0].mxu0
          %v2225 = vadd.f32 0.0, %v2224
          %v2226 = vpop.f32.mrb[0].mxu0
          %2227 = vmatprep.mubr.bf16.mxu0 0
          %2228 = vmatmul.mubr.bf16.gmra.mrb[0].mxu0 %v2151
          %v2229 = vpop.f32.mrb[0].mxu0
          %v2230 = vadd.f32 0.0, %v2229
          %v2231 = vpop.f32.mrb[0].mxu0
          %v2232 = vpop.f32.mrb[0].mxu0
          %v2233 = vadd.f32 0.0, %v2232
          %v2234 = vpop.f32.mrb[0].mxu0
          %2235 = vmatprep.mubr.bf16.mxu0 0
          %2236 = vmatmul.mubr.bf16.gmra.mrb[0].mxu0 %v2152
          %v2237 = vpop.f32.mrb[0].mxu0
          %v2238 = vadd.f32 0.0, %v2237
          %v2239 = vpop.f32.mrb[0].mxu0
          %v2240 = vpop.f32.mrb[0].mxu0
          %v2241 = vadd.f32 0.0, %v2240
          %v2242 = vpop.f32.mrb[0].mxu0
          %2243 = vmatprep.mubr.bf16.mxu0 0
          %2244 = vmatmul.mubr.bf16.gmra.mrb[0].mxu0 %v2153
          %v2245 = vpop.f32.mrb[0].mxu0
          %v2246 = vadd.f32 0.0, %v2245
          %v2247 = vpop.f32.mrb[0].mxu0
          %v2248 = vpop.f32.mrb[0].mxu0
          %v2249 = vadd.f32 0.0, %v2248
          %v2250 = vpop.f32.mrb[0].mxu0
          %2251 = vmatprep.mubr.bf16.mxu0 0
          %2252 = vmatmul.mubr.bf16.gmra.mrb[0].mxu0 %v2154
          %v2253 = vpop.f32.mrb[0].mxu0
          %v2254 = vadd.f32 0.0, %v2253
          %v2255 = vpop.f32.mrb[0].mxu0
          %v2256 = vpop.f32.mrb[0].mxu0
          %v2257 = vadd.f32 0.0, %v2256
          %v2258 = vpop.f32.mrb[0].mxu0
          %2259 = vdwg.mxu0
          %v2260 = vsub.f32 %v1884, %v2029
          %v2261 = vsub.f32 %v1887, %v2032
          %v2262 = vsub.f32 %v1892, %v2037
          %v2263 = vsub.f32 %v1895, %v2040
          %v2264 = vsub.f32 %v1900, %v2045
          %v2265 = vsub.f32 %v1903, %v2048
          %v2266 = vsub.f32 %v1908, %v2053
          %v2267 = vsub.f32 %v1911, %v2056
          %v2268 = vsub.f32 %v1916, %v2061
          %v2269 = vsub.f32 %v1919, %v2064
          %v2270 = vsub.f32 %v1924, %v2069
          %v2271 = vsub.f32 %v1927, %v2072
          %v2272 = vsub.f32 %v1932, %v2077
          %v2273 = vsub.f32 %v1935, %v2080
          %v2274 = vsub.f32 %v1940, %v2085
          %v2275 = vsub.f32 %v1943, %v2088
          %v2276 = vsub.f32 %v2198, %v1884
          %v2277 = vsub.f32 %v2201, %v1887
          %v2278 = vsub.f32 %v2206, %v1892
          %v2279 = vsub.f32 %v2209, %v1895
          %v2280 = vsub.f32 %v2214, %v1900
          %v2281 = vsub.f32 %v2217, %v1903
          %v2282 = vsub.f32 %v2222, %v1908
          %v2283 = vsub.f32 %v2225, %v1911
          %v2284 = vsub.f32 %v2230, %v1916
          %v2285 = vsub.f32 %v2233, %v1919
          %v2286 = vsub.f32 %v2238, %v1924
          %v2287 = vsub.f32 %v2241, %v1927
          %v2288 = vsub.f32 %v2246, %v1932
          %v2289 = vsub.f32 %v2249, %v1935
          %v2290 = vsub.f32 %v2254, %v1940
          %v2291 = vsub.f32 %v2257, %v1943
          %v2292 = vsub.f32 %v2276, %v2029
          %v2293 = vsub.f32 %v2277, %v2032
          %v2294 = vsub.f32 %v2278, %v2037
          %v2295 = vsub.f32 %v2279, %v2040
          %v2296 = vsub.f32 %v2280, %v2045
          %v2297 = vsub.f32 %v2281, %v2048
          %v2298 = vsub.f32 %v2282, %v2053
          %v2299 = vsub.f32 %v2283, %v2056
          %v2300 = vsub.f32 %v2284, %v2061
          %v2301 = vsub.f32 %v2285, %v2064
          %v2302 = vsub.f32 %v2286, %v2069
          %v2303 = vsub.f32 %v2287, %v2072
          %v2304 = vsub.f32 %v2288, %v2077
          %v2305 = vsub.f32 %v2289, %v2080
          %v2306 = vsub.f32 %v2290, %v2085
          %v2307 = vsub.f32 %v2291, %v2088
          %v2308 = vpack.c.bf16 %v2261, %v2260
          %v2309 = vpack.c.bf16 %v2263, %v2262
          %v2310 = vpack.c.bf16 %v2265, %v2264
          %v2311 = vpack.c.bf16 %v2267, %v2266
          %v2312 = vpack.c.bf16 %v2269, %v2268
          %v2313 = vpack.c.bf16 %v2271, %v2270
          %v2314 = vpack.c.bf16 %v2273, %v2272
          %v2315 = vpack.c.bf16 %v2275, %v2274
          %v2316 = vpack.c.bf16 %v2293, %v2292
          %v2317 = vpack.c.bf16 %v2295, %v2294
          %v2318 = vpack.c.bf16 %v2297, %v2296
          %v2319 = vpack.c.bf16 %v2299, %v2298
          %v2320 = vpack.c.bf16 %v2301, %v2300
          %v2321 = vpack.c.bf16 %v2303, %v2302
          %v2322 = vpack.c.bf16 %v2305, %v2304
          %v2323 = vpack.c.bf16 %v2307, %v2306
          %s2324 = scalar_lea.vmem [#allocation7], 384
          %v2325 = vld [vmem:[%s2324] sm:$0xf]
          %v2326 = vld [vmem:[%s2324 + $0x4] sm:$0xf]
          %v2327 = vld [vmem:[%s2324 + $0x8] sm:$0xf]
          %v2328 = vld [vmem:[%s2324 + $0xc] sm:$0xf]
          %v2329 = vld [vmem:[%s2324 + $0x10] sm:$0xf]
          %v2330 = vld [vmem:[%s2324 + $0x14] sm:$0xf]
          %v2331 = vld [vmem:[%s2324 + $0x18] sm:$0xf]
          %v2332 = vld [vmem:[%s2324 + $0x1c] sm:$0xf]
          %v2333 = vld [vmem:[%s2324 + $0x20] sm:$0xf]
          %v2334 = vld [vmem:[%s2324 + $0x24] sm:$0xf]
          %v2335 = vld [vmem:[%s2324 + $0x28] sm:$0xf]
          %v2336 = vld [vmem:[%s2324 + $0x2c] sm:$0xf]
          %v2337 = vld [vmem:[%s2324 + $0x30] sm:$0xf]
          %v2338 = vld [vmem:[%s2324 + $0x34] sm:$0xf]
          %v2339 = vld [vmem:[%s2324 + $0x38] sm:$0xf]
          %v2340 = vld [vmem:[%s2324 + $0x3c] sm:$0xf]
          %s2341 = scalar_lea.vmem [#allocation7], 448
          %v2342 = vld [vmem:[%s2341] sm:$0xf]
          %v2343 = vld [vmem:[%s2341 + $0x4] sm:$0xf]
          %v2344 = vld [vmem:[%s2341 + $0x8] sm:$0xf]
          %v2345 = vld [vmem:[%s2341 + $0xc] sm:$0xf]
          %v2346 = vld [vmem:[%s2341 + $0x10] sm:$0xf]
          %v2347 = vld [vmem:[%s2341 + $0x14] sm:$0xf]
          %v2348 = vld [vmem:[%s2341 + $0x18] sm:$0xf]
          %v2349 = vld [vmem:[%s2341 + $0x1c] sm:$0xf]
          %v2350 = vld [vmem:[%s2341 + $0x20] sm:$0xf]
          %v2351 = vld [vmem:[%s2341 + $0x24] sm:$0xf]
          %v2352 = vld [vmem:[%s2341 + $0x28] sm:$0xf]
          %v2353 = vld [vmem:[%s2341 + $0x2c] sm:$0xf]
          %v2354 = vld [vmem:[%s2341 + $0x30] sm:$0xf]
          %v2355 = vld [vmem:[%s2341 + $0x34] sm:$0xf]
          %v2356 = vld [vmem:[%s2341 + $0x38] sm:$0xf]
          %v2357 = vld [vmem:[%s2341 + $0x3c] sm:$0xf]
          %v2374 = vunpack.c.l.b16 %v2325
          %v2375 = vunpack.c.l.b16 %v2326
          %v2376 = vunpack.c.l.b16 %v2327
          %v2377 = vunpack.c.l.b16 %v2328
          %v2378 = vunpack.c.l.b16 %v2329
          %v2379 = vunpack.c.l.b16 %v2330
          %v2380 = vunpack.c.l.b16 %v2331
          %v2381 = vunpack.c.l.b16 %v2332
          %v2382 = vunpack.c.l.b16 %v2333
          %v2383 = vunpack.c.l.b16 %v2334
          %v2384 = vunpack.c.l.b16 %v2335
          %v2385 = vunpack.c.l.b16 %v2336
          %v2386 = vunpack.c.l.b16 %v2337
          %v2387 = vunpack.c.l.b16 %v2338
          %v2388 = vunpack.c.l.b16 %v2339
          %v2389 = vunpack.c.l.b16 %v2340
          %v2390 = vpack.c.b16 %v2375, %v2374
          %v2391 = vpack.c.b16 %v2377, %v2376
          %v2392 = vpack.c.b16 %v2379, %v2378
          %v2393 = vpack.c.b16 %v2381, %v2380
          %v2394 = vpack.c.b16 %v2383, %v2382
          %v2395 = vpack.c.b16 %v2385, %v2384
          %v2396 = vpack.c.b16 %v2387, %v2386
          %v2397 = vpack.c.b16 %v2389, %v2388
          %2406 = vmatprep.subr.bf16.mxu0 0
          %2407 = vmatpush1.bf16.msra.mxu0 %v2390
          %2408 = vmatprep.subr.bf16.mxu0 0
          %2409 = vmatpush1.bf16.msra.mxu0 %v2391
          %2410 = vmatprep.subr.bf16.mxu0 0
          %2411 = vmatpush1.bf16.msra.mxu0 %v2392
          %2412 = vmatprep.subr.bf16.mxu0 0
          %2413 = vmatpush1.bf16.msra.mxu0 %v2393
          %2414 = vmatprep.subr.bf16.mxu0 0
          %2415 = vmatpush1.bf16.msra.mxu0 %v2394
          %2416 = vmatprep.subr.bf16.mxu0 0
          %2417 = vmatpush1.bf16.msra.mxu0 %v2395
          %2418 = vmatprep.subr.bf16.mxu0 0
          %2419 = vmatpush1.bf16.msra.mxu0 %v2396
          %2420 = vmatprep.subr.bf16.mxu0 0
          %2421 = vmatpush1.bf16.msra.mxu0 %v2397
          %2422 = vmatprep.subr.bf16.mxu0 0
          %2423 = vmatpush1.bf16.msra.mxu0 0
          %2424 = vmatprep.subr.bf16.mxu0 0
          %2425 = vmatpush1.bf16.msra.mxu0 0
          %2426 = vmatprep.subr.bf16.mxu0 0
          %2427 = vmatpush1.bf16.msra.mxu0 0
          %2428 = vmatprep.subr.bf16.mxu0 0
          %2429 = vmatpush1.bf16.msra.mxu0 0
          %2430 = vmatprep.subr.bf16.mxu0 0
          %2431 = vmatpush1.bf16.msra.mxu0 0
          %2432 = vmatprep.subr.bf16.mxu0 0
          %2433 = vmatpush1.bf16.msra.mxu0 0
          %2434 = vmatprep.subr.bf16.mxu0 0
          %2435 = vmatpush1.bf16.msra.mxu0 0
          %2436 = vmatprep.subr.bf16.mxu0 0
          %2437 = vmatpush1.bf16.msra.mxu0 0
          %2438 = vmatprep.mubr.bf16.mxu0 0
          %2439 = vmatmul.mubr.bf16.gmra.mrb[0].mxu0 %v2308
          %v2440 = vpop.f32.mrb[0].mxu0
          %v2441 = vadd.f32 0.0, %v2440
          %v2442 = vpop.f32.mrb[0].mxu0
          %v2443 = vpop.f32.mrb[0].mxu0
          %v2444 = vadd.f32 0.0, %v2443
          %v2445 = vpop.f32.mrb[0].mxu0
          %2446 = vmatprep.mubr.bf16.mxu0 0
          %2447 = vmatmul.mubr.bf16.gmra.mrb[0].mxu0 %v2309
          %v2448 = vpop.f32.mrb[0].mxu0
          %v2449 = vadd.f32 0.0, %v2448
          %v2450 = vpop.f32.mrb[0].mxu0
          %v2451 = vpop.f32.mrb[0].mxu0
          %v2452 = vadd.f32 0.0, %v2451
          %v2453 = vpop.f32.mrb[0].mxu0
          %2454 = vmatprep.mubr.bf16.mxu0 0
          %2455 = vmatmul.mubr.bf16.gmra.mrb[0].mxu0 %v2310
          %v2456 = vpop.f32.mrb[0].mxu0
          %v2457 = vadd.f32 0.0, %v2456
          %v2458 = vpop.f32.mrb[0].mxu0
          %v2459 = vpop.f32.mrb[0].mxu0
          %v2460 = vadd.f32 0.0, %v2459
          %v2461 = vpop.f32.mrb[0].mxu0
          %2462 = vmatprep.mubr.bf16.mxu0 0
          %2463 = vmatmul.mubr.bf16.gmra.mrb[0].mxu0 %v2311
          %v2464 = vpop.f32.mrb[0].mxu0
          %v2465 = vadd.f32 0.0, %v2464
          %v2466 = vpop.f32.mrb[0].mxu0
          %v2467 = vpop.f32.mrb[0].mxu0
          %v2468 = vadd.f32 0.0, %v2467
          %v2469 = vpop.f32.mrb[0].mxu0
          %2470 = vmatprep.mubr.bf16.mxu0 0
          %2471 = vmatmul.mubr.bf16.gmra.mrb[0].mxu0 %v2312
          %v2472 = vpop.f32.mrb[0].mxu0
          %v2473 = vadd.f32 0.0, %v2472
          %v2474 = vpop.f32.mrb[0].mxu0
          %v2475 = vpop.f32.mrb[0].mxu0
          %v2476 = vadd.f32 0.0, %v2475
          %v2477 = vpop.f32.mrb[0].mxu0
          %2478 = vmatprep.mubr.bf16.mxu0 0
          %2479 = vmatmul.mubr.bf16.gmra.mrb[0].mxu0 %v2313
          %v2480 = vpop.f32.mrb[0].mxu0
          %v2481 = vadd.f32 0.0, %v2480
          %v2482 = vpop.f32.mrb[0].mxu0
          %v2483 = vpop.f32.mrb[0].mxu0
          %v2484 = vadd.f32 0.0, %v2483
          %v2485 = vpop.f32.mrb[0].mxu0
          %2486 = vmatprep.mubr.bf16.mxu0 0
          %2487 = vmatmul.mubr.bf16.gmra.mrb[0].mxu0 %v2314
          %v2488 = vpop.f32.mrb[0].mxu0
          %v2489 = vadd.f32 0.0, %v2488
          %v2490 = vpop.f32.mrb[0].mxu0
          %v2491 = vpop.f32.mrb[0].mxu0
          %v2492 = vadd.f32 0.0, %v2491
          %v2493 = vpop.f32.mrb[0].mxu0
          %2494 = vmatprep.mubr.bf16.mxu0 0
          %2495 = vmatmul.mubr.bf16.gmra.mrb[0].mxu0 %v2315
          %v2496 = vpop.f32.mrb[0].mxu0
          %v2497 = vadd.f32 0.0, %v2496
          %v2498 = vpop.f32.mrb[0].mxu0
          %v2499 = vpop.f32.mrb[0].mxu0
          %v2500 = vadd.f32 0.0, %v2499
          %v2501 = vpop.f32.mrb[0].mxu0
          %2502 = vdwg.mxu0
          %v2519 = vunpack.c.l.b16 %v2342
          %v2520 = vunpack.c.l.b16 %v2343
          %v2521 = vunpack.c.l.b16 %v2344
          %v2522 = vunpack.c.l.b16 %v2345
          %v2523 = vunpack.c.l.b16 %v2346
          %v2524 = vunpack.c.l.b16 %v2347
          %v2525 = vunpack.c.l.b16 %v2348
          %v2526 = vunpack.c.l.b16 %v2349
          %v2527 = vunpack.c.l.b16 %v2350
          %v2528 = vunpack.c.l.b16 %v2351
          %v2529 = vunpack.c.l.b16 %v2352
          %v2530 = vunpack.c.l.b16 %v2353
          %v2531 = vunpack.c.l.b16 %v2354
          %v2532 = vunpack.c.l.b16 %v2355
          %v2533 = vunpack.c.l.b16 %v2356
          %v2534 = vunpack.c.l.b16 %v2357
          %v2535 = vpack.c.b16 %v2520, %v2519
          %v2536 = vpack.c.b16 %v2522, %v2521
          %v2537 = vpack.c.b16 %v2524, %v2523
          %v2538 = vpack.c.b16 %v2526, %v2525
          %v2539 = vpack.c.b16 %v2528, %v2527
          %v2540 = vpack.c.b16 %v2530, %v2529
          %v2541 = vpack.c.b16 %v2532, %v2531
          %v2542 = vpack.c.b16 %v2534, %v2533
          %2551 = vmatprep.subr.bf16.mxu0 0
          %2552 = vmatpush1.bf16.msra.mxu0 %v2535
          %2553 = vmatprep.subr.bf16.mxu0 0
          %2554 = vmatpush1.bf16.msra.mxu0 %v2536
          %2555 = vmatprep.subr.bf16.mxu0 0
          %2556 = vmatpush1.bf16.msra.mxu0 %v2537
          %2557 = vmatprep.subr.bf16.mxu0 0
          %2558 = vmatpush1.bf16.msra.mxu0 %v2538
          %2559 = vmatprep.subr.bf16.mxu0 0
          %2560 = vmatpush1.bf16.msra.mxu0 %v2539
          %2561 = vmatprep.subr.bf16.mxu0 0
          %2562 = vmatpush1.bf16.msra.mxu0 %v2540
          %2563 = vmatprep.subr.bf16.mxu0 0
          %2564 = vmatpush1.bf16.msra.mxu0 %v2541
          %2565 = vmatprep.subr.bf16.mxu0 0
          %2566 = vmatpush1.bf16.msra.mxu0 %v2542
          %2567 = vmatprep.subr.bf16.mxu0 0
          %2568 = vmatpush1.bf16.msra.mxu0 0
          %2569 = vmatprep.subr.bf16.mxu0 0
          %2570 = vmatpush1.bf16.msra.mxu0 0
          %2571 = vmatprep.subr.bf16.mxu0 0
          %2572 = vmatpush1.bf16.msra.mxu0 0
          %2573 = vmatprep.subr.bf16.mxu0 0
          %2574 = vmatpush1.bf16.msra.mxu0 0
          %2575 = vmatprep.subr.bf16.mxu0 0
          %2576 = vmatpush1.bf16.msra.mxu0 0
          %2577 = vmatprep.subr.bf16.mxu0 0
          %2578 = vmatpush1.bf16.msra.mxu0 0
          %2579 = vmatprep.subr.bf16.mxu0 0
          %2580 = vmatpush1.bf16.msra.mxu0 0
          %2581 = vmatprep.subr.bf16.mxu0 0
          %2582 = vmatpush1.bf16.msra.mxu0 0
          %2583 = vmatprep.mubr.bf16.mxu0 0
          %2584 = vmatmul.mubr.bf16.gmra.mrb[0].mxu0 %v2316
          %v2585 = vpop.f32.mrb[0].mxu0
          %v2586 = vadd.f32 0.0, %v2585
          %v2587 = vpop.f32.mrb[0].mxu0
          %v2588 = vpop.f32.mrb[0].mxu0
          %v2589 = vadd.f32 0.0, %v2588
          %v2590 = vpop.f32.mrb[0].mxu0
          %2591 = vmatprep.mubr.bf16.mxu0 0
          %2592 = vmatmul.mubr.bf16.gmra.mrb[0].mxu0 %v2317
          %v2593 = vpop.f32.mrb[0].mxu0
          %v2594 = vadd.f32 0.0, %v2593
          %v2595 = vpop.f32.mrb[0].mxu0
          %v2596 = vpop.f32.mrb[0].mxu0
          %v2597 = vadd.f32 0.0, %v2596
          %v2598 = vpop.f32.mrb[0].mxu0
          %2599 = vmatprep.mubr.bf16.mxu0 0
          %2600 = vmatmul.mubr.bf16.gmra.mrb[0].mxu0 %v2318
          %v2601 = vpop.f32.mrb[0].mxu0
          %v2602 = vadd.f32 0.0, %v2601
          %v2603 = vpop.f32.mrb[0].mxu0
          %v2604 = vpop.f32.mrb[0].mxu0
          %v2605 = vadd.f32 0.0, %v2604
          %v2606 = vpop.f32.mrb[0].mxu0
          %2607 = vmatprep.mubr.bf16.mxu0 0
          %2608 = vmatmul.mubr.bf16.gmra.mrb[0].mxu0 %v2319
          %v2609 = vpop.f32.mrb[0].mxu0
          %v2610 = vadd.f32 0.0, %v2609
          %v2611 = vpop.f32.mrb[0].mxu0
          %v2612 = vpop.f32.mrb[0].mxu0
          %v2613 = vadd.f32 0.0, %v2612
          %v2614 = vpop.f32.mrb[0].mxu0
          %2615 = vmatprep.mubr.bf16.mxu0 0
          %2616 = vmatmul.mubr.bf16.gmra.mrb[0].mxu0 %v2320
          %v2617 = vpop.f32.mrb[0].mxu0
          %v2618 = vadd.f32 0.0, %v2617
          %v2619 = vpop.f32.mrb[0].mxu0
          %v2620 = vpop.f32.mrb[0].mxu0
          %v2621 = vadd.f32 0.0, %v2620
          %v2622 = vpop.f32.mrb[0].mxu0
          %2623 = vmatprep.mubr.bf16.mxu0 0
          %2624 = vmatmul.mubr.bf16.gmra.mrb[0].mxu0 %v2321
          %v2625 = vpop.f32.mrb[0].mxu0
          %v2626 = vadd.f32 0.0, %v2625
          %v2627 = vpop.f32.mrb[0].mxu0
          %v2628 = vpop.f32.mrb[0].mxu0
          %v2629 = vadd.f32 0.0, %v2628
          %v2630 = vpop.f32.mrb[0].mxu0
          %2631 = vmatprep.mubr.bf16.mxu0 0
          %2632 = vmatmul.mubr.bf16.gmra.mrb[0].mxu0 %v2322
          %v2633 = vpop.f32.mrb[0].mxu0
          %v2634 = vadd.f32 0.0, %v2633
          %v2635 = vpop.f32.mrb[0].mxu0
          %v2636 = vpop.f32.mrb[0].mxu0
          %v2637 = vadd.f32 0.0, %v2636
          %v2638 = vpop.f32.mrb[0].mxu0
          %2639 = vmatprep.mubr.bf16.mxu0 0
          %2640 = vmatmul.mubr.bf16.gmra.mrb[0].mxu0 %v2323
          %v2641 = vpop.f32.mrb[0].mxu0
          %v2642 = vadd.f32 0.0, %v2641
          %v2643 = vpop.f32.mrb[0].mxu0
          %v2644 = vpop.f32.mrb[0].mxu0
          %v2645 = vadd.f32 0.0, %v2644
          %v2646 = vpop.f32.mrb[0].mxu0
          %2647 = vdwg.mxu0
          %v2648 = vadd.bf16 %v2308, %v2316
          %v2649 = vadd.bf16 %v2309, %v2317
          %v2650 = vadd.bf16 %v2310, %v2318
          %v2651 = vadd.bf16 %v2311, %v2319
          %v2652 = vadd.bf16 %v2312, %v2320
          %v2653 = vadd.bf16 %v2313, %v2321
          %v2654 = vadd.bf16 %v2314, %v2322
          %v2655 = vadd.bf16 %v2315, %v2323
          %v2656 = vadd.bf16 %v2325, %v2342
          %v2657 = vadd.bf16 %v2326, %v2343
          %v2658 = vadd.bf16 %v2327, %v2344
          %v2659 = vadd.bf16 %v2328, %v2345
          %v2660 = vadd.bf16 %v2329, %v2346
          %v2661 = vadd.bf16 %v2330, %v2347
          %v2662 = vadd.bf16 %v2331, %v2348
          %v2663 = vadd.bf16 %v2332, %v2349
          %v2664 = vadd.bf16 %v2333, %v2350
          %v2665 = vadd.bf16 %v2334, %v2351
          %v2666 = vadd.bf16 %v2335, %v2352
          %v2667 = vadd.bf16 %v2336, %v2353
          %v2668 = vadd.bf16 %v2337, %v2354
          %v2669 = vadd.bf16 %v2338, %v2355
          %v2670 = vadd.bf16 %v2339, %v2356
          %v2671 = vadd.bf16 %v2340, %v2357
          %v2688 = vunpack.c.l.b16 %v2656
          %v2689 = vunpack.c.l.b16 %v2657
          %v2690 = vunpack.c.l.b16 %v2658
          %v2691 = vunpack.c.l.b16 %v2659
          %v2692 = vunpack.c.l.b16 %v2660
          %v2693 = vunpack.c.l.b16 %v2661
          %v2694 = vunpack.c.l.b16 %v2662
          %v2695 = vunpack.c.l.b16 %v2663
          %v2696 = vunpack.c.l.b16 %v2664
          %v2697 = vunpack.c.l.b16 %v2665
          %v2698 = vunpack.c.l.b16 %v2666
          %v2699 = vunpack.c.l.b16 %v2667
          %v2700 = vunpack.c.l.b16 %v2668
          %v2701 = vunpack.c.l.b16 %v2669
          %v2702 = vunpack.c.l.b16 %v2670
          %v2703 = vunpack.c.l.b16 %v2671
          %v2704 = vpack.c.b16 %v2689, %v2688
          %v2705 = vpack.c.b16 %v2691, %v2690
          %v2706 = vpack.c.b16 %v2693, %v2692
          %v2707 = vpack.c.b16 %v2695, %v2694
          %v2708 = vpack.c.b16 %v2697, %v2696
          %v2709 = vpack.c.b16 %v2699, %v2698
          %v2710 = vpack.c.b16 %v2701, %v2700
          %v2711 = vpack.c.b16 %v2703, %v2702
          %2720 = vmatprep.subr.bf16.mxu0 0
          %2721 = vmatpush1.bf16.msra.mxu0 %v2704
          %2722 = vmatprep.subr.bf16.mxu0 0
          %2723 = vmatpush1.bf16.msra.mxu0 %v2705
          %2724 = vmatprep.subr.bf16.mxu0 0
          %2725 = vmatpush1.bf16.msra.mxu0 %v2706
          %2726 = vmatprep.subr.bf16.mxu0 0
          %2727 = vmatpush1.bf16.msra.mxu0 %v2707
          %2728 = vmatprep.subr.bf16.mxu0 0
          %2729 = vmatpush1.bf16.msra.mxu0 %v2708
          %2730 = vmatprep.subr.bf16.mxu0 0
          %2731 = vmatpush1.bf16.msra.mxu0 %v2709
          %2732 = vmatprep.subr.bf16.mxu0 0
          %2733 = vmatpush1.bf16.msra.mxu0 %v2710
          %2734 = vmatprep.subr.bf16.mxu0 0
          %2735 = vmatpush1.bf16.msra.mxu0 %v2711
          %2736 = vmatprep.subr.bf16.mxu0 0
          %2737 = vmatpush1.bf16.msra.mxu0 0
          %2738 = vmatprep.subr.bf16.mxu0 0
          %2739 = vmatpush1.bf16.msra.mxu0 0
          %2740 = vmatprep.subr.bf16.mxu0 0
          %2741 = vmatpush1.bf16.msra.mxu0 0
          %2742 = vmatprep.subr.bf16.mxu0 0
          %2743 = vmatpush1.bf16.msra.mxu0 0
          %2744 = vmatprep.subr.bf16.mxu0 0
          %2745 = vmatpush1.bf16.msra.mxu0 0
          %2746 = vmatprep.subr.bf16.mxu0 0
          %2747 = vmatpush1.bf16.msra.mxu0 0
          %2748 = vmatprep.subr.bf16.mxu0 0
          %2749 = vmatpush1.bf16.msra.mxu0 0
          %2750 = vmatprep.subr.bf16.mxu0 0
          %2751 = vmatpush1.bf16.msra.mxu0 0
          %2752 = vmatprep.mubr.bf16.mxu0 0
          %2753 = vmatmul.mubr.bf16.gmra.mrb[0].mxu0 %v2648
          %v2754 = vpop.f32.mrb[0].mxu0
          %v2755 = vadd.f32 0.0, %v2754
          %v2756 = vpop.f32.mrb[0].mxu0
          %v2757 = vpop.f32.mrb[0].mxu0
          %v2758 = vadd.f32 0.0, %v2757
          %v2759 = vpop.f32.mrb[0].mxu0
          %2760 = vmatprep.mubr.bf16.mxu0 0
          %2761 = vmatmul.mubr.bf16.gmra.mrb[0].mxu0 %v2649
          %v2762 = vpop.f32.mrb[0].mxu0
          %v2763 = vadd.f32 0.0, %v2762
          %v2764 = vpop.f32.mrb[0].mxu0
          %v2765 = vpop.f32.mrb[0].mxu0
          %v2766 = vadd.f32 0.0, %v2765
          %v2767 = vpop.f32.mrb[0].mxu0
          %2768 = vmatprep.mubr.bf16.mxu0 0
          %2769 = vmatmul.mubr.bf16.gmra.mrb[0].mxu0 %v2650
          %v2770 = vpop.f32.mrb[0].mxu0
          %v2771 = vadd.f32 0.0, %v2770
          %v2772 = vpop.f32.mrb[0].mxu0
          %v2773 = vpop.f32.mrb[0].mxu0
          %v2774 = vadd.f32 0.0, %v2773
          %v2775 = vpop.f32.mrb[0].mxu0
          %2776 = vmatprep.mubr.bf16.mxu0 0
          %2777 = vmatmul.mubr.bf16.gmra.mrb[0].mxu0 %v2651
          %v2778 = vpop.f32.mrb[0].mxu0
          %v2779 = vadd.f32 0.0, %v2778
          %v2780 = vpop.f32.mrb[0].mxu0
          %v2781 = vpop.f32.mrb[0].mxu0
          %v2782 = vadd.f32 0.0, %v2781
          %v2783 = vpop.f32.mrb[0].mxu0
          %2784 = vmatprep.mubr.bf16.mxu0 0
          %2785 = vmatmul.mubr.bf16.gmra.mrb[0].mxu0 %v2652
          %v2786 = vpop.f32.mrb[0].mxu0
          %v2787 = vadd.f32 0.0, %v2786
          %v2788 = vpop.f32.mrb[0].mxu0
          %v2789 = vpop.f32.mrb[0].mxu0
          %v2790 = vadd.f32 0.0, %v2789
          %v2791 = vpop.f32.mrb[0].mxu0
          %2792 = vmatprep.mubr.bf16.mxu0 0
          %2793 = vmatmul.mubr.bf16.gmra.mrb[0].mxu0 %v2653
          %v2794 = vpop.f32.mrb[0].mxu0
          %v2795 = vadd.f32 0.0, %v2794
          %v2796 = vpop.f32.mrb[0].mxu0
          %v2797 = vpop.f32.mrb[0].mxu0
          %v2798 = vadd.f32 0.0, %v2797
          %v2799 = vpop.f32.mrb[0].mxu0
          %2800 = vmatprep.mubr.bf16.mxu0 0
          %2801 = vmatmul.mubr.bf16.gmra.mrb[0].mxu0 %v2654
          %v2802 = vpop.f32.mrb[0].mxu0
          %v2803 = vadd.f32 0.0, %v2802
          %v2804 = vpop.f32.mrb[0].mxu0
          %v2805 = vpop.f32.mrb[0].mxu0
          %v2806 = vadd.f32 0.0, %v2805
          %v2807 = vpop.f32.mrb[0].mxu0
          %2808 = vmatprep.mubr.bf16.mxu0 0
          %2809 = vmatmul.mubr.bf16.gmra.mrb[0].mxu0 %v2655
          %v2810 = vpop.f32.mrb[0].mxu0
          %v2811 = vadd.f32 0.0, %v2810
          %v2812 = vpop.f32.mrb[0].mxu0
          %v2813 = vpop.f32.mrb[0].mxu0
          %v2814 = vadd.f32 0.0, %v2813
          %v2815 = vpop.f32.mrb[0].mxu0
          %2816 = vdwg.mxu0
          %v2817 = vsub.f32 %v2441, %v2586
          %v2818 = vsub.f32 %v2444, %v2589
          %v2819 = vsub.f32 %v2449, %v2594
          %v2820 = vsub.f32 %v2452, %v2597
          %v2821 = vsub.f32 %v2457, %v2602
          %v2822 = vsub.f32 %v2460, %v2605
          %v2823 = vsub.f32 %v2465, %v2610
          %v2824 = vsub.f32 %v2468, %v2613
          %v2825 = vsub.f32 %v2473, %v2618
          %v2826 = vsub.f32 %v2476, %v2621
          %v2827 = vsub.f32 %v2481, %v2626
          %v2828 = vsub.f32 %v2484, %v2629
          %v2829 = vsub.f32 %v2489, %v2634
          %v2830 = vsub.f32 %v2492, %v2637
          %v2831 = vsub.f32 %v2497, %v2642
          %v2832 = vsub.f32 %v2500, %v2645
          %v2833 = vsub.f32 %v2755, %v2441
          %v2834 = vsub.f32 %v2758, %v2444
          %v2835 = vsub.f32 %v2763, %v2449
          %v2836 = vsub.f32 %v2766, %v2452
          %v2837 = vsub.f32 %v2771, %v2457
          %v2838 = vsub.f32 %v2774, %v2460
          %v2839 = vsub.f32 %v2779, %v2465
          %v2840 = vsub.f32 %v2782, %v2468
          %v2841 = vsub.f32 %v2787, %v2473
          %v2842 = vsub.f32 %v2790, %v2476
          %v2843 = vsub.f32 %v2795, %v2481
          %v2844 = vsub.f32 %v2798, %v2484
          %v2845 = vsub.f32 %v2803, %v2489
          %v2846 = vsub.f32 %v2806, %v2492
          %v2847 = vsub.f32 %v2811, %v2497
          %v2848 = vsub.f32 %v2814, %v2500
          %v2849 = vsub.f32 %v2833, %v2586
          %v2850 = vsub.f32 %v2834, %v2589
          %v2851 = vsub.f32 %v2835, %v2594
          %v2852 = vsub.f32 %v2836, %v2597
          %v2853 = vsub.f32 %v2837, %v2602
          %v2854 = vsub.f32 %v2838, %v2605
          %v2855 = vsub.f32 %v2839, %v2610
          %v2856 = vsub.f32 %v2840, %v2613
          %v2857 = vsub.f32 %v2841, %v2618
          %v2858 = vsub.f32 %v2842, %v2621
          %v2859 = vsub.f32 %v2843, %v2626
          %v2860 = vsub.f32 %v2844, %v2629
          %v2861 = vsub.f32 %v2845, %v2634
          %v2862 = vsub.f32 %v2846, %v2637
          %v2863 = vsub.f32 %v2847, %v2642
          %v2864 = vsub.f32 %v2848, %v2645
          %s2865 = smul.u32 %s331, 128
          %s2866 = scalar_lea.vmem %s317, %s2865 [#allocation10]
          %2867 = vst [vmem:[%s2866] sm:$0xff] %v2817
          %2868 = vst [vmem:[%s2866 + $0x8] sm:$0xff] %v2818
          %2869 = vst [vmem:[%s2866 + $0x10] sm:$0xff] %v2819
          %2870 = vst [vmem:[%s2866 + $0x18] sm:$0xff] %v2820
          %2871 = vst [vmem:[%s2866 + $0x20] sm:$0xff] %v2821
          %2872 = vst [vmem:[%s2866 + $0x28] sm:$0xff] %v2822
          %2873 = vst [vmem:[%s2866 + $0x30] sm:$0xff] %v2823
          %2874 = vst [vmem:[%s2866 + $0x38] sm:$0xff] %v2824
          %2875 = vst [vmem:[%s2866 + $0x40] sm:$0xff] %v2825
          %2876 = vst [vmem:[%s2866 + $0x48] sm:$0xff] %v2826
          %2877 = vst [vmem:[%s2866 + $0x50] sm:$0xff] %v2827
          %2878 = vst [vmem:[%s2866 + $0x58] sm:$0xff] %v2828
          %2879 = vst [vmem:[%s2866 + $0x60] sm:$0xff] %v2829
          %2880 = vst [vmem:[%s2866 + $0x68] sm:$0xff] %v2830
          %2881 = vst [vmem:[%s2866 + $0x70] sm:$0xff] %v2831
          %2882 = vst [vmem:[%s2866 + $0x78] sm:$0xff] %v2832
          %s2883 = scalar_lea.vmem %s324, %s2865 [#allocation11]
          %2884 = vst [vmem:[%s2883] sm:$0xff] %v2849
          %2885 = vst [vmem:[%s2883 + $0x8] sm:$0xff] %v2850
          %2886 = vst [vmem:[%s2883 + $0x10] sm:$0xff] %v2851
          %2887 = vst [vmem:[%s2883 + $0x18] sm:$0xff] %v2852
          %2888 = vst [vmem:[%s2883 + $0x20] sm:$0xff] %v2853
          %2889 = vst [vmem:[%s2883 + $0x28] sm:$0xff] %v2854
          %2890 = vst [vmem:[%s2883 + $0x30] sm:$0xff] %v2855
          %2891 = vst [vmem:[%s2883 + $0x38] sm:$0xff] %v2856
          %2892 = vst [vmem:[%s2883 + $0x40] sm:$0xff] %v2857
          %2893 = vst [vmem:[%s2883 + $0x48] sm:$0xff] %v2858
          %2894 = vst [vmem:[%s2883 + $0x50] sm:$0xff] %v2859
          %2895 = vst [vmem:[%s2883 + $0x58] sm:$0xff] %v2860
          %2896 = vst [vmem:[%s2883 + $0x60] sm:$0xff] %v2861
          %2897 = vst [vmem:[%s2883 + $0x68] sm:$0xff] %v2862
          %2898 = vst [vmem:[%s2883 + $0x70] sm:$0xff] %v2863
          %2899 = vst [vmem:[%s2883 + $0x78] sm:$0xff] %v2864
        $region57: #{tpu_custom_call.1} parent=35 // loop_footer
          %s335 = sadd.s32 1, %s331
        $region58: #{tpu_custom_call.1} parent=35 // loop_footer_branch
          %330 = sbr.rel target = $region54
        $region59: #{tpu_custom_call.1} parent=35 // loop_exit
          _
        %s2900 = sand.u32 %s132, 1
        %s2901 = scalar_lea.sflag [#allocation4], %s2900
        %s2902 = sand.u32 %s132, 1
        %s2903 = smul.addr %s2902, 512
        %s2904 = scalar_lea.vmem [#allocation10], %s2903
        %s2905 = sand.u32 %s158, 1
        %s2906 = scalar_lea.sflag [#allocation12], %s2905
        %s2907 = sand.u32 %s158, 1
        %s2908 = smul.addr %s2907, 512
        %s2909 = scalar_lea.vmem [#allocation11], %s2908
        // Predicated region
        $region60: #{tpu_custom_call.1} parent=35 // pred_check
          %p2910 = pneg %p142
        $region61: #{tpu_custom_call.1} parent=35 // pred_check_branch
          %2912 = sbr.rel (%p2910) target = $region63
        $region62: #{tpu_custom_call.1} parent=35 // pred_region
          %s2913 = smul.u32 4, %s30
          %s2915 = ssub.s32 8192, 8192
          %2916 = vsyncadd %s2901, %s2915
          %s2917 = smul.addr %s2913, 16
          %s2918 = smul.addr %s2917, 128
          %s2919 = scalar_lea.hbm %s4, %s2918
          %s2920 = sshll.u32 %s2904, 4
          %s2921 = int_to_ptr.vmem [resolvable:$true] %s2920
          %2926 = dma.vmem_to_hbm [thread:$0]  %s2921, 8192, %s2919, %s2901, 128, 128, 8
        $region63: #{tpu_custom_call.1} parent=35 // pred_fallthru
          _
        // Predicated region
        $region64: #{tpu_custom_call.1} parent=35 // pred_check
          %p2927 = pneg %p168
        $region65: #{tpu_custom_call.1} parent=35 // pred_check_branch
          %2929 = sbr.rel (%p2927) target = $region67
        $region66: #{tpu_custom_call.1} parent=35 // pred_region
          %s2930 = smul.u32 4, %s30
          %s2932 = ssub.s32 8192, 8192
          %2933 = vsyncadd %s2906, %s2932
          %s2934 = smul.addr %s2930, 16
          %s2935 = smul.addr %s2934, 128
          %s2936 = scalar_lea.hbm %s5, %s2935
          %s2937 = sshll.u32 %s2909, 4
          %s2938 = int_to_ptr.vmem [resolvable:$true] %s2937
          %2943 = dma.vmem_to_hbm [thread:$0]  %s2938, 8192, %s2936, %s2906, 128, 128, 8
        $region67: #{tpu_custom_call.1} parent=35 // pred_fallthru
          _
      $region36: #{tpu_custom_call.1} parent=5 // pred_fallthru
        _
      %p2944 = scmp.le.s32.totalorder 2, %s25
      // Predicated region
      $region68: #{tpu_custom_call.1} parent=5 // pred_check
        %p2945 = pneg %p2944
      $region69: #{tpu_custom_call.1} parent=5 // pred_check_branch
        %2947 = sbr.rel (%p2945) target = $region71
      $region70: #{tpu_custom_call.1} parent=5 // pred_region
        %s2948 = ssub.s32 %s25, 2
        // Predicated region
        $region72: #{tpu_custom_call.1} parent=70 // pred_check
          %p2949 = pneg %p148
        $region73: #{tpu_custom_call.1} parent=70 // pred_check_branch
          %2951 = sbr.rel (%p2949) target = $region75
        $region74: #{tpu_custom_call.1} parent=70 // pred_region
          %s2952 = sand.u32 %s133, 1
          %s2953 = scalar_lea.sflag [#allocation4], %s2952
          %s2954 = sand.u32 %s133, 1
          %s2955 = smul.addr %s2954, 512
          %s2956 = scalar_lea.vmem [#allocation10], %s2955
          %2957 = dma.done %s2953, 8192
        $region75: #{tpu_custom_call.1} parent=70 // pred_fallthru
          _
        // Predicated region
        $region76: #{tpu_custom_call.1} parent=70 // pred_check
          %p2958 = pneg %p174
        $region77: #{tpu_custom_call.1} parent=70 // pred_check_branch
          %2960 = sbr.rel (%p2958) target = $region79
        $region78: #{tpu_custom_call.1} parent=70 // pred_region
          %s2961 = sand.u32 %s159, 1
          %s2962 = scalar_lea.sflag [#allocation12], %s2961
          %s2963 = sand.u32 %s159, 1
          %s2964 = smul.addr %s2963, 512
          %s2965 = scalar_lea.vmem [#allocation11], %s2964
          %2966 = dma.done %s2962, 8192
        $region79: #{tpu_custom_call.1} parent=70 // pred_fallthru
          _
      $region71: #{tpu_custom_call.1} parent=5 // pred_fallthru
        _
    $region6: #{tpu_custom_call.1} parent=1 // loop_footer
      %s29 = sadd.s32 1, %s25
    $region7: #{tpu_custom_call.1} parent=1 // loop_footer_branch
      %24 = sbr.rel target = $region3
    $region8: #{tpu_custom_call.1} parent=1 // loop_exit
      _
    %2967 = vsyncpa [#allocation3], 1
    %s2968 = scalar_lea.sflag [#allocation3], 1
    %2969 = vsyncpa %s2968, 1
    %2970 = vsyncpa [#allocation6], 1
    %s2971 = scalar_lea.sflag [#allocation6], 1
    %2972 = vsyncpa %s2971, 1
    %2973 = vsyncpa [#allocation9], 1
    %2974 = vsyncpa [#allocation4], 1
    %s2975 = scalar_lea.sflag [#allocation4], 1
    %2976 = vsyncpa %s2975, 1
    %2977 = vsyncpa [#allocation12], 1
    %s2978 = scalar_lea.sflag [#allocation12], 1
    %2979 = vsyncpa %s2978, 1

</llo_original>
